<compile_context>
chip_gen: v5e
topology: v5e:2x2
jax: 0.10.0
libtpu: 0.0.40
codegen_flags: <defaults>
</compile_context>

<pallas_src>
import functools
import math

import jax
import jax.numpy as jnp
from jax import lax
from jax.experimental import pallas as pl
from jax.experimental.pallas import tpu as pltpu

LANE = 128
_VMEM_LIMIT = 32 * 1024 * 1024  # conservative; tiles are tiny, leaves v7x headroom


# ------------------------------ small helpers -------------------------------


def _round_up(v, m):
    return ((v + m - 1) // m) * m


def _k_tile(c_pad):
    for t in (512, 256, 128):
        if c_pad % t == 0:
            return min(t, c_pad)
    return c_pad


def _prop_tiles(n):
    """Row / contraction tile sizes for the [N,N] adjacency matmuls."""
    if n >= 512:
        tm, tk = 256, 512
    elif n >= 256:
        tm, tk = 256, 256
    else:
        tm, tk = 128, 128
    n_pad = _round_up(n, max(tm, tk))
    return n_pad, tm, tk


def _pad2(a, r, c):
    return jnp.pad(a, ((0, r - a.shape[0]), (0, c - a.shape[1])))


def _pad1(a, c):
    return jnp.pad(a, ((0, c - a.shape[0]),))


def _erf(x):
    # Rational erf approximation (A&S 7.1.26, |err| < 1.5e-7) so the exact-GELU lowers
    # with guaranteed-supported Mosaic ops (exp/abs/select only).
    a1, a2, a3, a4, a5 = 0.254829592, -0.284496736, 1.421413741, -1.453152027, 1.061405429
    p = 0.3275911
    ax = jnp.abs(x)
    t = 1.0 / (1.0 + p * ax)
    poly = ((((a5 * t + a4) * t + a3) * t + a2) * t + a1) * t
    y = 1.0 - poly * jnp.exp(-ax * ax)
    return jnp.where(x >= 0.0, y, -y)


def _gelu_exact(x):
    return 0.5 * x * (1.0 + _erf(x * 0.7071067811865476))


# ----------------------------- Pallas kernels -------------------------------


def _linear_gelu_ln_kernel(x_ref, w_ref, b_ref, lng_ref, lnb_ref, o_ref, acc_ref,
                           *, h_true, eps):
    """out = LayerNorm(GELU(x @ W + b)) over the true (unpadded) feature width h_true."""
    k = pl.program_id(1)

    @pl.when(k == 0)
    def _():
        acc_ref[...] = jnp.zeros_like(acc_ref)

    acc_ref[...] += jnp.dot(x_ref[...], w_ref[...], preferred_element_type=jnp.float32)

    @pl.when(k == pl.num_programs(1) - 1)
    def _():
        y = acc_ref[...] + b_ref[...]
        g = _gelu_exact(y)  # padded columns stay exactly 0 (zero W cols / zero bias)
        inv_h = 1.0 / float(h_true)
        mu = jnp.sum(g, axis=-1, keepdims=True) * inv_h
        var = jnp.sum(g * g, axis=-1, keepdims=True) * inv_h - mu * mu
        norm = (g - mu) * lax.rsqrt(var + eps)
        # padded columns are re-zeroed by the zero-padded LayerNorm affine params.
        o_ref[...] = (norm * lng_ref[...] + lnb_ref[...]).astype(o_ref.dtype)


def _linear_kernel(x_ref, w_ref, b_ref, o_ref, acc_ref):
    """out = x @ W + b (tiled contraction, f32 accumulator)."""
    k = pl.program_id(1)

    @pl.when(k == 0)
    def _():
        acc_ref[...] = jnp.zeros_like(acc_ref)

    acc_ref[...] += jnp.dot(x_ref[...], w_ref[...], preferred_element_type=jnp.float32)

    @pl.when(k == pl.num_programs(1) - 1)
    def _():
        o_ref[...] = (acc_ref[...] + b_ref[...]).astype(o_ref.dtype)


def _gpr_step_kernel(sc_ref, a_ref, x_ref, h_ref, xo_ref, ho_ref, acc_ref):
    """x_new = A_hat @ x ;  hidden_new = sc[0] * hidden + sc[1] * x_new  (fused)."""
    k = pl.program_id(1)

    @pl.when(k == 0)
    def _():
        acc_ref[...] = jnp.zeros_like(acc_ref)

    # bf16 MXU inputs (adjacency and x both stored bf16), f32 accumulation.
    acc_ref[...] += jnp.dot(a_ref[...], x_ref[...], preferred_element_type=jnp.float32)

    @pl.when(k == pl.num_programs(1) - 1)
    def _():
        x_new = acc_ref[...]
        xo_ref[...] = x_new.astype(xo_ref.dtype)          # bf16 carry for next step
        ho_ref[...] = (sc_ref[0] * h_ref[...] + sc_ref[1] * x_new).astype(ho_ref.dtype)


# ----------------------------- Pallas wrappers -------------------------------


def pallas_linear_gelu_ln(x, w, b, ln_g, ln_b, *, h_true, tm):
    n_pad, cin_p = x.shape
    cout_p = w.shape[1]
    tk = _k_tile(cin_p)
    kernel = functools.partial(_linear_gelu_ln_kernel, h_true=h_true, eps=1e-5)
    return pl.pallas_call(
        kernel,
        out_shape=jax.ShapeDtypeStruct((n_pad, cout_p), jnp.float32),
        grid=(n_pad // tm, cin_p // tk),
        in_specs=[
            pl.BlockSpec((tm, tk), lambda i, k: (i, k)),
            pl.BlockSpec((tk, cout_p), lambda i, k: (k, 0)),
            pl.BlockSpec((1, cout_p), lambda i, k: (0, 0)),
            pl.BlockSpec((1, cout_p), lambda i, k: (0, 0)),
            pl.BlockSpec((1, cout_p), lambda i, k: (0, 0)),
        ],
        out_specs=pl.BlockSpec((tm, cout_p), lambda i, k: (i, 0)),
        scratch_shapes=[pltpu.VMEM((tm, cout_p), jnp.float32)],
        compiler_params=pltpu.CompilerParams(
            dimension_semantics=("parallel", "arbitrary"),
            vmem_limit_bytes=_VMEM_LIMIT),
    )(x, w, b.reshape(1, -1), ln_g.reshape(1, -1), ln_b.reshape(1, -1))


def pallas_linear(x, w, b, *, tm):
    n_pad, cin_p = x.shape
    cout_p = w.shape[1]
    tk = _k_tile(cin_p)
    return pl.pallas_call(
        _linear_kernel,
        out_shape=jax.ShapeDtypeStruct((n_pad, cout_p), jnp.float32),
        grid=(n_pad // tm, cin_p // tk),
        in_specs=[
            pl.BlockSpec((tm, tk), lambda i, k: (i, k)),
            pl.BlockSpec((tk, cout_p), lambda i, k: (k, 0)),
            pl.BlockSpec((1, cout_p), lambda i, k: (0, 0)),
        ],
        out_specs=pl.BlockSpec((tm, cout_p), lambda i, k: (i, 0)),
        scratch_shapes=[pltpu.VMEM((tm, cout_p), jnp.float32)],
        compiler_params=pltpu.CompilerParams(
            dimension_semantics=("parallel", "arbitrary"),
            vmem_limit_bytes=_VMEM_LIMIT),
    )(x, w, b.reshape(1, -1))


def pallas_gpr_step(scales, adj_bf16, x_bf16, hidden, *, tm, tk):
    n_pad, c_pad = x_bf16.shape
    return pl.pallas_call(
        _gpr_step_kernel,
        out_shape=(jax.ShapeDtypeStruct((n_pad, c_pad), jnp.bfloat16),   # next-step x
                   jax.ShapeDtypeStruct((n_pad, c_pad), jnp.float32)),   # hidden acc
        grid=(n_pad // tm, n_pad // tk),
        in_specs=[
            pl.BlockSpec(memory_space=pltpu.MemorySpace.SMEM),   # [s0, gamma_k] scalars
            pl.BlockSpec((tm, tk), lambda i, k: (i, k)),          # adjacency tile (bf16)
            pl.BlockSpec((tk, c_pad), lambda i, k: (k, 0)),       # x row-chunk (bf16)
            pl.BlockSpec((tm, c_pad), lambda i, k: (i, 0)),       # resident hidden block
        ],
        out_specs=(pl.BlockSpec((tm, c_pad), lambda i, k: (i, 0)),
                   pl.BlockSpec((tm, c_pad), lambda i, k: (i, 0))),
        scratch_shapes=[pltpu.VMEM((tm, c_pad), jnp.float32)],
        compiler_params=pltpu.CompilerParams(
            dimension_semantics=("parallel", "arbitrary"),
            vmem_limit_bytes=_VMEM_LIMIT),
    )(scales, adj_bf16, x_bf16, hidden)


# --------------------------- adjacency (glue JAX) ----------------------------


def build_norm_adj(edge_index, num_nodes, n_pad):
    """Dense replica of PyG gcn_norm(add_self_loops=True): D^-1/2 (A + I) D^-1/2.
    A[target, source] = 1 per edge (source, target); existing self loops are replaced
    by weight-1 loops (add_remaining_self_loops semantics). Stored bf16 (zero-padded)."""
    n = num_nodes
    row, col = edge_index  # row = source, col = target
    a = jnp.zeros((n, n), jnp.float32).at[col, row].add(1.0)
    eye = jnp.eye(n, dtype=jnp.float32)
    a = a * (1.0 - eye) + eye
    deg = a.sum(axis=1)
    dinv = jnp.where(deg > 0, lax.rsqrt(deg), 0.0)
    a = dinv[:, None] * a * dinv[None, :]
    a = jnp.pad(a, ((0, n_pad - n), (0, n_pad - n)))
    return a.astype(jnp.bfloat16)


# ------------------------------ GPRGNN forward -------------------------------


def gprgnn_forward(params, x, adj_bf16, *, num_nodes, K, tm, tk_adj):
    n_pad = adj_bf16.shape[0]
    cin = x.shape[1]
    hid = params["w1"].shape[1]
    cout = params["w3"].shape[1]

    cin_p = _round_up(cin, LANE)
    h_p = _round_up(hid, LANE)
    c_p = _round_up(cout, LANE)

    # zero-pad nodes + feature lanes once; padding is inert (see module docstring).
    x_p = _pad2(x.astype(jnp.float32), n_pad, cin_p)

    # --- MLP (num_layers=3): 2 x [Linear -> GELU -> LayerNorm] + final Linear ---
    h1 = pallas_linear_gelu_ln(
        x_p,
        _pad2(params["w1"], cin_p, h_p), _pad1(params["b1"], h_p),
        _pad1(params["ln1_g"], h_p), _pad1(params["ln1_b"], h_p),
        h_true=hid, tm=tm)
    h2 = pallas_linear_gelu_ln(
        h1,
        _pad2(params["w2"], h_p, h_p), _pad1(params["b2"], h_p),
        _pad1(params["ln2_g"], h_p), _pad1(params["ln2_b"], h_p),
        h_true=hid, tm=tm)
    z = pallas_linear(
        h2, _pad2(params["w3"], h_p, c_p), _pad1(params["b3"], c_p), tm=tm)

    # --- GPR propagation: hidden = gamma0*z ; x_{k+1} = A_hat @ x_k ; hidden += gamma_k*x ---
    gam = params["gamma"].astype(jnp.float32)
    xk = z.astype(jnp.bfloat16)   # bf16 carry (the MXU input dtype anyway)
    hid_acc = z
    if K == 0:
        hid_acc = gam[0] * z
    for k in range(K):
        s0 = gam[0] if k == 0 else jnp.float32(1.0)  # fold gamma0*z init into step 0
        scales = jnp.stack([s0, gam[k + 1]]).astype(jnp.float32)
        xk, hid_acc = pallas_gpr_step(scales, adj_bf16, xk, hid_acc, tm=tm, tk=tk_adj)

    return hid_acc[:num_nodes, :cout]


# -------------------------- pure-JAX reference (mirror) ----------------------


def reference_forward(params, x, adj_bf16, *, num_nodes, K):
    adj = adj_bf16[:num_nodes, :num_nodes].astype(jnp.float32)

    def lin_gelu_ln(h, w, b, g, beta, eps=1e-5):
        y = h @ w + b
        ge = _gelu_exact(y)
        mu = jnp.mean(ge, axis=-1, keepdims=True)
        var = jnp.mean(ge * ge, axis=-1, keepdims=True) - mu * mu
        return (ge - mu) * lax.rsqrt(var + eps) * g + beta

    h = x.astype(jnp.float32)
    h = lin_gelu_ln(h, params["w1"], params["b1"], params["ln1_g"], params["ln1_b"])
    h = lin_gelu_ln(h, params["w2"], params["b2"], params["ln2_g"], params["ln2_b"])
    z = h @ params["w3"] + params["b3"]

    gam = params["gamma"].astype(jnp.float32)
    hidden = gam[0] * z
    xk = z
    for k in range(K):
        xk_bf = xk.astype(jnp.bfloat16).astype(jnp.float32)  # mirror kernel bf16 carry
        xk = adj @ xk_bf
        hidden = hidden + gam[k + 1] * xk
    return hidden


# ---------------------------------- main -------------------------------------


if __name__ == "__main__":
    key = jax.random.PRNGKey(0)

    num_nodes = 64
    in_channels = 16
    hidden_channels = 32
    out_channels = 8
    K = 10
    alpha = 0.1
    num_edges = 256

    ks = jax.random.split(key, 10)

    # deterministic synthetic graph + features
    row = jax.random.randint(ks[0], (num_edges,), 0, num_nodes)
    col = jax.random.randint(ks[1], (num_edges,), 0, num_nodes)
    edge_index = jnp.stack([row, col], axis=0)
    x = jax.random.normal(ks[2], (num_nodes, in_channels), dtype=jnp.float32)

    n_pad, tm, tk_adj = _prop_tiles(num_nodes)
    adj_bf16 = build_norm_adj(edge_index, num_nodes, n_pad)

    # GPR_prop Init='Random': uniform(-b, b), b = sqrt(3/(K+1)), L1-normalized (deterministic here)
    bound = math.sqrt(3.0 / (K + 1))
    gamma = jax.random.uniform(ks[3], (K + 1,), minval=-bound, maxval=bound, dtype=jnp.float32)
    gamma = gamma / jnp.sum(jnp.abs(gamma))

    params = {
        "w1": 0.1 * jax.random.normal(ks[4], (in_channels, hidden_channels), jnp.float32),
        "b1": 0.1 * jax.random.normal(ks[5], (hidden_channels,), jnp.float32),
        "ln1_g": jnp.ones((hidden_channels,), jnp.float32),
        "ln1_b": jnp.zeros((hidden_channels,), jnp.float32),
        "w2": 0.1 * jax.random.normal(ks[6], (hidden_channels, hidden_channels), jnp.float32),
        "b2": 0.1 * jax.random.normal(ks[7], (hidden_channels,), jnp.float32),
        "ln2_g": jnp.ones((hidden_channels,), jnp.float32),
        "ln2_b": jnp.zeros((hidden_channels,), jnp.float32),
        "w3": 0.1 * jax.random.normal(ks[8], (hidden_channels, out_channels), jnp.float32),
        "b3": 0.1 * jax.random.normal(ks[9], (out_channels,), jnp.float32),
        "gamma": gamma,
    }

    fwd = jax.jit(functools.partial(
        gprgnn_forward, num_nodes=num_nodes, K=K, tm=tm, tk_adj=tk_adj))

    out = fwd(params, x, adj_bf16)
    out = jax.block_until_ready(out)

    assert out.shape == (num_nodes, out_channels), out.shape
    assert bool(jnp.all(jnp.isfinite(out)))

    # correctness check against a pure-JAX reference with mirrored numerics
    ref = reference_forward(params, x, adj_bf16, num_nodes=num_nodes, K=K)
    ref = jax.block_until_ready(ref)
    max_err = float(jnp.max(jnp.abs(out - ref)))
    assert max_err < 5e-2, f"max abs error vs reference: {max_err}"

    print("KERNEL_OK")
</pallas_src>

<mosaic_0001>
module attributes {stable_mosaic.version = 11 : i64} {
  func.func @_linear_kernel(%arg0: i32, %arg1: i32, %arg2: memref<128x128xf32, #tpu.memory_space<vmem>>, %arg3: memref<128x128xf32, #tpu.memory_space<vmem>>, %arg4: memref<1x128xf32, #tpu.memory_space<vmem>>, %arg5: memref<128x128xf32, #tpu.memory_space<vmem>>, %arg6: memref<128x128xf32, #tpu.memory_space<vmem>>) attributes {dimension_semantics = [#tpu.dimension_semantics<parallel>, #tpu.dimension_semantics<arbitrary>], iteration_bounds = array<i64: 1, 1>, scalar_prefetch = 0 : i64, scratch_operands = 1 : i64, tpu.core_type = #tpu.core_type<tc>, window_params = [{transform_indices = @transform_0, window_bounds = array<i64: 128, 128>}, {transform_indices = @transform_1, window_bounds = array<i64: 128, 128>}, {pipeline_mode = #tpu.pipeline_mode<synchronous>, transform_indices = @transform_2, window_bounds = array<i64: 1, 128>}, {transform_indices = @transform_3, window_bounds = array<i64: 128, 128>}]} {
    %c0_i32 = arith.constant 0 : i32
    %0 = arith.cmpi eq, %arg1, %c0_i32 : i32
    %1 = arith.extui %0 : i1 to i32
    %c0_i32_0 = arith.constant 0 : i32
    %2 = arith.cmpi ne, %1, %c0_i32_0 : i32
    scf.if %2 {
      %cst_10 = arith.constant 0.000000e+00 : f32
      %12 = vector.broadcast %cst_10 : f32 to vector<128x128xf32>
      %c0_11 = arith.constant 0 : index
      %c0_12 = arith.constant 0 : index
      %13 = vector.load %arg6[%c0_11, %c0_12] : memref<128x128xf32, #tpu.memory_space<vmem>>, vector<128x128xf32>
      tpu.vector_store %arg6[%c0_11, %c0_12], %12 {strides = array<i32>} : memref<128x128xf32, #tpu.memory_space<vmem>>, vector<128x128xf32>,
    } else {
    }
    %c0 = arith.constant 0 : index
    %c0_1 = arith.constant 0 : index
    %3 = vector.load %arg6[%c0, %c0_1] : memref<128x128xf32, #tpu.memory_space<vmem>>, vector<128x128xf32>
    %c0_2 = arith.constant 0 : index
    %c0_3 = arith.constant 0 : index
    %4 = vector.load %arg2[%c0_2, %c0_3] : memref<128x128xf32, #tpu.memory_space<vmem>>, vector<128x128xf32>
    %c0_4 = arith.constant 0 : index
    %c0_5 = arith.constant 0 : index
    %5 = vector.load %arg3[%c0_4, %c0_5] : memref<128x128xf32, #tpu.memory_space<vmem>>, vector<128x128xf32>
    %cst = arith.constant dense<0.000000e+00> : vector<128x128xf32>
    %6 = tpu.matmul %4, %5, %cst {dimension_numbers = #tpu.dot_dimension_numbers<[1], [0], [0], [1], [0, 0, 1, 1], [], []>} : vector<128x128xf32>, vector<128x128xf32>, vector<128x128xf32> -> vector<128x128xf32>
    %7 = arith.addf %3, %6 : vector<128x128xf32>
    %c0_6 = arith.constant 0 : index
    %c0_7 = arith.constant 0 : index
    %8 = vector.load %arg6[%c0_6, %c0_7] : memref<128x128xf32, #tpu.memory_space<vmem>>, vector<128x128xf32>
    tpu.vector_store %arg6[%c0_6, %c0_7], %7 {strides = array<i32>} : memref<128x128xf32, #tpu.memory_space<vmem>>, vector<128x128xf32>,
    %c0_i32_8 = arith.constant 0 : i32
    %9 = arith.cmpi eq, %arg1, %c0_i32_8 : i32
    %10 = arith.extui %9 : i1 to i32
    %c0_i32_9 = arith.constant 0 : i32
    %11 = arith.cmpi ne, %10, %c0_i32_9 : i32
    scf.if %11 {
      %c0_10 = arith.constant 0 : index
      %c0_11 = arith.constant 0 : index
      %12 = vector.load %arg6[%c0_10, %c0_11] : memref<128x128xf32, #tpu.memory_space<vmem>>, vector<128x128xf32>
      %c0_12 = arith.constant 0 : index
      %c0_13 = arith.constant 0 : index
      %13 = vector.load %arg4[%c0_12, %c0_13] : memref<1x128xf32, #tpu.memory_space<vmem>>, vector<1x128xf32>
      %14 = vector.broadcast %13 : vector<1x128xf32> to vector<128x128xf32>
      %15 = arith.addf %12, %14 : vector<128x128xf32>
      %c0_14 = arith.constant 0 : index
      %c0_15 = arith.constant 0 : index
      %16 = vector.load %arg5[%c0_14, %c0_15] : memref<128x128xf32, #tpu.memory_space<vmem>>, vector<128x128xf32>
      tpu.vector_store %arg5[%c0_14, %c0_15], %15 {strides = array<i32>} : memref<128x128xf32, #tpu.memory_space<vmem>>, vector<128x128xf32>,
    } else {
    }
    return
  }
  func.func @transform_0(%arg0: i32, %arg1: i32) -> (i32, i32) {
    %c0_i32 = arith.constant 0 : i32
    return %arg0, %arg1 : i32, i32
  }
  func.func @transform_1(%arg0: i32, %arg1: i32) -> (i32, i32) {
    %c0_i32 = arith.constant 0 : i32
    %c0_i32_0 = arith.constant 0 : i32
    return %arg1, %c0_i32 : i32, i32
  }
  func.func @transform_2(%arg0: i32, %arg1: i32) -> (i32, i32) {
    %c0_i32 = arith.constant 0 : i32
    %c0_i32_0 = arith.constant 0 : i32
    %c0_i32_1 = arith.constant 0 : i32
    return %c0_i32, %c0_i32_0 : i32, i32
  }
  func.func @transform_3(%arg0: i32, %arg1: i32) -> (i32, i32) {
    %c0_i32 = arith.constant 0 : i32
    %c0_i32_0 = arith.constant 0 : i32
    return %arg0, %c0_i32 : i32, i32
  }
}

module attributes {stable_mosaic.version = 11 : i64} {
  func.func @_linear_gelu_ln_kernel(%arg0: i32, %arg1: i32, %arg2: memref<128x128xf32, #tpu.memory_space<vmem>>, %arg3: memref<128x128xf32, #tpu.memory_space<vmem>>, %arg4: memref<1x128xf32, #tpu.memory_space<vmem>>, %arg5: memref<1x128xf32, #tpu.memory_space<vmem>>, %arg6: memref<1x128xf32, #tpu.memory_space<vmem>>, %arg7: memref<128x128xf32, #tpu.memory_space<vmem>>, %arg8: memref<128x128xf32, #tpu.memory_space<vmem>>) attributes {dimension_semantics = [#tpu.dimension_semantics<parallel>, #tpu.dimension_semantics<arbitrary>], iteration_bounds = array<i64: 1, 1>, scalar_prefetch = 0 : i64, scratch_operands = 1 : i64, tpu.core_type = #tpu.core_type<tc>, window_params = [{transform_indices = @transform_0, window_bounds = array<i64: 128, 128>}, {transform_indices = @transform_1, window_bounds = array<i64: 128, 128>}, {pipeline_mode = #tpu.pipeline_mode<synchronous>, transform_indices = @transform_2, window_bounds = array<i64: 1, 128>}, {pipeline_mode = #tpu.pipeline_mode<synchronous>, transform_indices = @transform_3, window_bounds = array<i64: 1, 128>}, {pipeline_mode = #tpu.pipeline_mode<synchronous>, transform_indices = @transform_4, window_bounds = array<i64: 1, 128>}, {transform_indices = @transform_5, window_bounds = array<i64: 128, 128>}]} {
    %c0_i32 = arith.constant 0 : i32
    %0 = arith.cmpi eq, %arg1, %c0_i32 : i32
    %1 = arith.extui %0 : i1 to i32
    %c0_i32_0 = arith.constant 0 : i32
    %2 = arith.cmpi ne, %1, %c0_i32_0 : i32
    scf.if %2 {
      %cst_10 = arith.constant 0.000000e+00 : f32
      %12 = vector.broadcast %cst_10 : f32 to vector<128x128xf32>
      %c0_11 = arith.constant 0 : index
      %c0_12 = arith.constant 0 : index
      %13 = vector.load %arg8[%c0_11, %c0_12] : memref<128x128xf32, #tpu.memory_space<vmem>>, vector<128x128xf32>
      tpu.vector_store %arg8[%c0_11, %c0_12], %12 {strides = array<i32>} : memref<128x128xf32, #tpu.memory_space<vmem>>, vector<128x128xf32>,
    } else {
    }
    %c0 = arith.constant 0 : index
    %c0_1 = arith.constant 0 : index
    %3 = vector.load %arg8[%c0, %c0_1] : memref<128x128xf32, #tpu.memory_space<vmem>>, vector<128x128xf32>
    %c0_2 = arith.constant 0 : index
    %c0_3 = arith.constant 0 : index
    %4 = vector.load %arg2[%c0_2, %c0_3] : memref<128x128xf32, #tpu.memory_space<vmem>>, vector<128x128xf32>
    %c0_4 = arith.constant 0 : index
    %c0_5 = arith.constant 0 : index
    %5 = vector.load %arg3[%c0_4, %c0_5] : memref<128x128xf32, #tpu.memory_space<vmem>>, vector<128x128xf32>
    %cst = arith.constant dense<0.000000e+00> : vector<128x128xf32>
    %6 = tpu.matmul %4, %5, %cst {dimension_numbers = #tpu.dot_dimension_numbers<[1], [0], [0], [1], [0, 0, 1, 1], [], []>} : vector<128x128xf32>, vector<128x128xf32>, vector<128x128xf32> -> vector<128x128xf32>
    %7 = arith.addf %3, %6 : vector<128x128xf32>
    %c0_6 = arith.constant 0 : index
    %c0_7 = arith.constant 0 : index
    %8 = vector.load %arg8[%c0_6, %c0_7] : memref<128x128xf32, #tpu.memory_space<vmem>>, vector<128x128xf32>
    tpu.vector_store %arg8[%c0_6, %c0_7], %7 {strides = array<i32>} : memref<128x128xf32, #tpu.memory_space<vmem>>, vector<128x128xf32>,
    %c0_i32_8 = arith.constant 0 : i32
    %9 = arith.cmpi eq, %arg1, %c0_i32_8 : i32
    %10 = arith.extui %9 : i1 to i32
    %c0_i32_9 = arith.constant 0 : i32
    %11 = arith.cmpi ne, %10, %c0_i32_9 : i32
    scf.if %11 {
      %c0_10 = arith.constant 0 : index
      %c0_11 = arith.constant 0 : index
      %12 = vector.load %arg8[%c0_10, %c0_11] : memref<128x128xf32, #tpu.memory_space<vmem>>, vector<128x128xf32>
      %c0_12 = arith.constant 0 : index
      %c0_13 = arith.constant 0 : index
      %13 = vector.load %arg4[%c0_12, %c0_13] : memref<1x128xf32, #tpu.memory_space<vmem>>, vector<1x128xf32>
      %14 = vector.broadcast %13 : vector<1x128xf32> to vector<128x128xf32>
      %15 = arith.addf %12, %14 : vector<128x128xf32>
      %cst_14 = arith.constant 5.000000e-01 : f32
      %16 = vector.broadcast %cst_14 : f32 to vector<128x128xf32>
      %17 = arith.mulf %16, %15 : vector<128x128xf32>
      %cst_15 = arith.constant 0.707106769 : f32
      %18 = vector.broadcast %cst_15 : f32 to vector<128x128xf32>
      %19 = arith.mulf %15, %18 : vector<128x128xf32>
      %20 = math.absf %19 : vector<128x128xf32>
      %cst_16 = arith.constant 0.327591091 : f32
      %21 = vector.broadcast %cst_16 : f32 to vector<128x128xf32>
      %22 = arith.mulf %21, %20 : vector<128x128xf32>
      %cst_17 = arith.constant 1.000000e+00 : f32
      %23 = vector.broadcast %cst_17 : f32 to vector<128x128xf32>
      %24 = arith.addf %23, %22 : vector<128x128xf32>
      %cst_18 = arith.constant 1.000000e+00 : f32
      %25 = vector.broadcast %cst_18 : f32 to vector<128x128xf32>
      %26 = arith.divf %25, %24 : vector<128x128xf32>
      %cst_19 = arith.constant 1.06140542 : f32
      %27 = vector.broadcast %cst_19 : f32 to vector<128x128xf32>
      %28 = arith.mulf %27, %26 : vector<128x128xf32>
      %cst_20 = arith.constant -1.45315206 : f32
      %29 = vector.broadcast %cst_20 : f32 to vector<128x128xf32>
      %30 = arith.addf %28, %29 : vector<128x128xf32>
      %31 = arith.mulf %30, %26 : vector<128x128xf32>
      %cst_21 = arith.constant 1.42141378 : f32
      %32 = vector.broadcast %cst_21 : f32 to vector<128x128xf32>
      %33 = arith.addf %31, %32 : vector<128x128xf32>
      %34 = arith.mulf %33, %26 : vector<128x128xf32>
      %cst_22 = arith.constant -0.284496725 : f32
      %35 = vector.broadcast %cst_22 : f32 to vector<128x128xf32>
      %36 = arith.addf %34, %35 : vector<128x128xf32>
      %37 = arith.mulf %36, %26 : vector<128x128xf32>
      %cst_23 = arith.constant 0.254829586 : f32
      %38 = vector.broadcast %cst_23 : f32 to vector<128x128xf32>
      %39 = arith.addf %37, %38 : vector<128x128xf32>
      %40 = arith.mulf %39, %26 : vector<128x128xf32>
      %cst_24 = arith.constant 0.000000e+00 : f32
      %41 = vector.broadcast %cst_24 : f32 to vector<128x128xf32>
      %42 = arith.subf %41, %20 : vector<128x128xf32>
      %43 = arith.mulf %42, %20 : vector<128x128xf32>
      %44 = math.exp %43 : vector<128x128xf32>
      %45 = arith.mulf %40, %44 : vector<128x128xf32>
      %cst_25 = arith.constant 1.000000e+00 : f32
      %46 = vector.broadcast %cst_25 : f32 to vector<128x128xf32>
      %47 = arith.subf %46, %45 : vector<128x128xf32>
      %cst_26 = arith.constant 0.000000e+00 : f32
      %48 = vector.broadcast %cst_26 : f32 to vector<128x128xf32>
      %49 = arith.cmpf oge, %19, %48 : vector<128x128xf32>
      %cst_27 = arith.constant 0.000000e+00 : f32
      %50 = vector.broadcast %cst_27 : f32 to vector<128x128xf32>
      %51 = arith.subf %50, %47 : vector<128x128xf32>
      %52 = arith.select %49, %47, %51 : vector<128x128xi1>, vector<128x128xf32>
      %cst_28 = arith.constant 1.000000e+00 : f32
      %53 = vector.broadcast %cst_28 : f32 to vector<128x128xf32>
      %54 = arith.addf %53, %52 : vector<128x128xf32>
      %55 = arith.mulf %17, %54 : vector<128x128xf32>
      %cst_29 = arith.constant dense<0.000000e+00> : vector<128xf32>
      %56 = vector.multi_reduction <add>, %55, %cst_29 [1] : vector<128x128xf32> to vector<128xf32>
      %57 = vector.shape_cast %56 : vector<128xf32> to vector<128x1xf32>
      %cst_30 = arith.constant 3.125000e-02 : f32
      %58 = vector.broadcast %cst_30 : f32 to vector<128x1xf32>
      %59 = arith.mulf %57, %58 : vector<128x1xf32>
      %60 = arith.mulf %55, %55 : vector<128x128xf32>
      %cst_31 = arith.constant dense<0.000000e+00> : vector<128xf32>
      %61 = vector.multi_reduction <add>, %60, %cst_31 [1] : vector<128x128xf32> to vector<128xf32>
      %62 = vector.shape_cast %61 : vector<128xf32> to vector<128x1xf32>
      %cst_32 = arith.constant 3.125000e-02 : f32
      %63 = vector.broadcast %cst_32 : f32 to vector<128x1xf32>
      %64 = arith.mulf %62, %63 : vector<128x1xf32>
      %65 = arith.mulf %59, %59 : vector<128x1xf32>
      %66 = arith.subf %64, %65 : vector<128x1xf32>
      %67 = vector.broadcast %59 : vector<128x1xf32> to vector<128x128xf32>
      %68 = arith.subf %55, %67 : vector<128x128xf32>
      %cst_33 = arith.constant 9.99999974E-6 : f32
      %69 = vector.broadcast %cst_33 : f32 to vector<128x1xf32>
      %70 = arith.addf %66, %69 : vector<128x1xf32>
      %71 = math.rsqrt %70 : vector<128x1xf32>
      %72 = vector.broadcast %71 : vector<128x1xf32> to vector<128x128xf32>
      %73 = arith.mulf %68, %72 : vector<128x128xf32>
      %c0_34 = arith.constant 0 : index
      %c0_35 = arith.constant 0 : index
      %74 = vector.load %arg5[%c0_34, %c0_35] : memref<1x128xf32, #tpu.memory_space<vmem>>, vector<1x128xf32>
      %75 = vector.broadcast %74 : vector<1x128xf32> to vector<128x128xf32>
      %76 = arith.mulf %73, %75 : vector<128x128xf32>
      %c0_36 = arith.constant 0 : index
      %c0_37 = arith.constant 0 : index
      %77 = vector.load %arg6[%c0_36, %c0_37] : memref<1x128xf32, #tpu.memory_space<vmem>>, vector<1x128xf32>
      %78 = vector.broadcast %77 : vector<1x128xf32> to vector<128x128xf32>
      %79 = arith.addf %76, %78 : vector<128x128xf32>
      %c0_38 = arith.constant 0 : index
      %c0_39 = arith.constant 0 : index
      %80 = vector.load %arg7[%c0_38, %c0_39] : memref<128x128xf32, #tpu.memory_space<vmem>>, vector<128x128xf32>
      tpu.vector_store %arg7[%c0_38, %c0_39], %79 {strides = array<i32>} : memref<128x128xf32, #tpu.memory_space<vmem>>, vector<128x128xf32>,
    } else {
    }
    return
  }
  func.func @transform_0(%arg0: i32, %arg1: i32) -> (i32, i32) {
    %c0_i32 = arith.constant 0 : i32
    return %arg0, %arg1 : i32, i32
  }
  func.func @transform_1(%arg0: i32, %arg1: i32) -> (i32, i32) {
    %c0_i32 = arith.constant 0 : i32
    %c0_i32_0 = arith.constant 0 : i32
    return %arg1, %c0_i32 : i32, i32
  }
  func.func @transform_2(%arg0: i32, %arg1: i32) -> (i32, i32) {
    %c0_i32 = arith.constant 0 : i32
    %c0_i32_0 = arith.constant 0 : i32
    %c0_i32_1 = arith.constant 0 : i32
    return %c0_i32, %c0_i32_0 : i32, i32
  }
  func.func @transform_3(%arg0: i32, %arg1: i32) -> (i32, i32) {
    %c0_i32 = arith.constant 0 : i32
    %c0_i32_0 = arith.constant 0 : i32
    %c0_i32_1 = arith.constant 0 : i32
    return %c0_i32, %c0_i32_0 : i32, i32
  }
  func.func @transform_4(%arg0: i32, %arg1: i32) -> (i32, i32) {
    %c0_i32 = arith.constant 0 : i32
    %c0_i32_0 = arith.constant 0 : i32
    %c0_i32_1 = arith.constant 0 : i32
    return %c0_i32, %c0_i32_0 : i32, i32
  }
  func.func @transform_5(%arg0: i32, %arg1: i32) -> (i32, i32) {
    %c0_i32 = arith.constant 0 : i32
    %c0_i32_0 = arith.constant 0 : i32
    return %arg0, %c0_i32 : i32, i32
  }
}

module attributes {stable_mosaic.version = 11 : i64} {
  func.func @_gpr_step_kernel(%arg0: i32, %arg1: i32, %arg2: memref<2xf32, #tpu.memory_space<smem>>, %arg3: memref<128x128xbf16, #tpu.memory_space<vmem>>, %arg4: memref<128x128xbf16, #tpu.memory_space<vmem>>, %arg5: memref<128x128xf32, #tpu.memory_space<vmem>>, %arg6: memref<128x128xbf16, #tpu.memory_space<vmem>>, %arg7: memref<128x128xf32, #tpu.memory_space<vmem>>, %arg8: memref<128x128xf32, #tpu.memory_space<vmem>>) attributes {dimension_semantics = [#tpu.dimension_semantics<parallel>, #tpu.dimension_semantics<arbitrary>], iteration_bounds = array<i64: 1, 1>, scalar_prefetch = 0 : i64, scratch_operands = 1 : i64, tpu.core_type = #tpu.core_type<tc>, window_params = [{transform_indices = @transform_0, window_bounds = array<i64: 2>}, {transform_indices = @transform_1, window_bounds = array<i64: 128, 128>}, {transform_indices = @transform_2, window_bounds = array<i64: 128, 128>}, {transform_indices = @transform_3, window_bounds = array<i64: 128, 128>}, {transform_indices = @transform_4, window_bounds = array<i64: 128, 128>}, {transform_indices = @transform_5, window_bounds = array<i64: 128, 128>}]} {
    %c0_i32 = arith.constant 0 : i32
    %0 = arith.cmpi eq, %arg1, %c0_i32 : i32
    %1 = arith.extui %0 : i1 to i32
    %c0_i32_0 = arith.constant 0 : i32
    %2 = arith.cmpi ne, %1, %c0_i32_0 : i32
    scf.if %2 {
      %cst_10 = arith.constant 0.000000e+00 : f32
      %12 = vector.broadcast %cst_10 : f32 to vector<128x128xf32>
      %c0_11 = arith.constant 0 : index
      %c0_12 = arith.constant 0 : index
      %13 = vector.load %arg8[%c0_11, %c0_12] : memref<128x128xf32, #tpu.memory_space<vmem>>, vector<128x128xf32>
      tpu.vector_store %arg8[%c0_11, %c0_12], %12 {strides = array<i32>} : memref<128x128xf32, #tpu.memory_space<vmem>>, vector<128x128xf32>,
    } else {
    }
    %c0 = arith.constant 0 : index
    %c0_1 = arith.constant 0 : index
    %3 = vector.load %arg8[%c0, %c0_1] : memref<128x128xf32, #tpu.memory_space<vmem>>, vector<128x128xf32>
    %c0_2 = arith.constant 0 : index
    %c0_3 = arith.constant 0 : index
    %4 = vector.load %arg3[%c0_2, %c0_3] : memref<128x128xbf16, #tpu.memory_space<vmem>>, vector<128x128xbf16>
    %c0_4 = arith.constant 0 : index
    %c0_5 = arith.constant 0 : index
    %5 = vector.load %arg4[%c0_4, %c0_5] : memref<128x128xbf16, #tpu.memory_space<vmem>>, vector<128x128xbf16>
    %cst = arith.constant dense<0.000000e+00> : vector<128x128xf32>
    %6 = tpu.matmul %4, %5, %cst {dimension_numbers = #tpu.dot_dimension_numbers<[1], [0], [0], [1], [0, 0, 1, 1], [], []>} : vector<128x128xbf16>, vector<128x128xbf16>, vector<128x128xf32> -> vector<128x128xf32>
    %7 = arith.addf %3, %6 : vector<128x128xf32>
    %c0_6 = arith.constant 0 : index
    %c0_7 = arith.constant 0 : index
    %8 = vector.load %arg8[%c0_6, %c0_7] : memref<128x128xf32, #tpu.memory_space<vmem>>, vector<128x128xf32>
    tpu.vector_store %arg8[%c0_6, %c0_7], %7 {strides = array<i32>} : memref<128x128xf32, #tpu.memory_space<vmem>>, vector<128x128xf32>,
    %c0_i32_8 = arith.constant 0 : i32
    %9 = arith.cmpi eq, %arg1, %c0_i32_8 : i32
    %10 = arith.extui %9 : i1 to i32
    %c0_i32_9 = arith.constant 0 : i32
    %11 = arith.cmpi ne, %10, %c0_i32_9 : i32
    scf.if %11 {
      %c0_10 = arith.constant 0 : index
      %c0_11 = arith.constant 0 : index
      %12 = vector.load %arg8[%c0_10, %c0_11] : memref<128x128xf32, #tpu.memory_space<vmem>>, vector<128x128xf32>
      %13 = arith.truncf %12 : vector<128x128xf32> to vector<128x128xbf16>
      %c0_12 = arith.constant 0 : index
      %c0_13 = arith.constant 0 : index
      %14 = vector.load %arg6[%c0_12, %c0_13] : memref<128x128xbf16, #tpu.memory_space<vmem>>, vector<128x128xbf16>
      tpu.vector_store %arg6[%c0_12, %c0_13], %13 {strides = array<i32>} : memref<128x128xbf16, #tpu.memory_space<vmem>>, vector<128x128xbf16>,
      %c0_14 = arith.constant 0 : index
      %15 = memref.load %arg2[%c0_14] : memref<2xf32, #tpu.memory_space<smem>>
      %c0_15 = arith.constant 0 : index
      %c0_16 = arith.constant 0 : index
      %16 = vector.load %arg5[%c0_15, %c0_16] : memref<128x128xf32, #tpu.memory_space<vmem>>, vector<128x128xf32>
      %17 = vector.broadcast %15 : f32 to vector<128x128xf32>
      %18 = arith.mulf %17, %16 : vector<128x128xf32>
      %c1 = arith.constant 1 : index
      %19 = memref.load %arg2[%c1] : memref<2xf32, #tpu.memory_space<smem>>
      %20 = vector.broadcast %19 : f32 to vector<128x128xf32>
      %21 = arith.mulf %20, %12 : vector<128x128xf32>
      %22 = arith.addf %18, %21 : vector<128x128xf32>
      %c0_17 = arith.constant 0 : index
      %c0_18 = arith.constant 0 : index
      %23 = vector.load %arg7[%c0_17, %c0_18] : memref<128x128xf32, #tpu.memory_space<vmem>>, vector<128x128xf32>
      tpu.vector_store %arg7[%c0_17, %c0_18], %22 {strides = array<i32>} : memref<128x128xf32, #tpu.memory_space<vmem>>, vector<128x128xf32>,
    } else {
    }
    return
  }
  func.func @transform_0(%arg0: i32, %arg1: i32) -> i32 {
    %c0_i32 = arith.constant 0 : i32
    %c0_i32_0 = arith.constant 0 : i32
    return %c0_i32 : i32
  }
  func.func @transform_1(%arg0: i32, %arg1: i32) -> (i32, i32) {
    %c0_i32 = arith.constant 0 : i32
    return %arg0, %arg1 : i32, i32
  }
  func.func @transform_2(%arg0: i32, %arg1: i32) -> (i32, i32) {
    %c0_i32 = arith.constant 0 : i32
    %c0_i32_0 = arith.constant 0 : i32
    return %arg1, %c0_i32 : i32, i32
  }
  func.func @transform_3(%arg0: i32, %arg1: i32) -> (i32, i32) {
    %c0_i32 = arith.constant 0 : i32
    %c0_i32_0 = arith.constant 0 : i32
    return %arg0, %c0_i32 : i32, i32
  }
  func.func @transform_4(%arg0: i32, %arg1: i32) -> (i32, i32) {
    %c0_i32 = arith.constant 0 : i32
    %c0_i32_0 = arith.constant 0 : i32
    return %arg0, %c0_i32 : i32, i32
  }
  func.func @transform_5(%arg0: i32, %arg1: i32) -> (i32, i32) {
    %c0_i32 = arith.constant 0 : i32
    %c0_i32_0 = arith.constant 0 : i32
    return %arg0, %c0_i32 : i32, i32
  }
}

module attributes {stable_mosaic.version = 11 : i64} {
  func.func @_gpr_step_kernel(%arg0: i32, %arg1: i32, %arg2: memref<2xf32, #tpu.memory_space<smem>>, %arg3: memref<128x128xbf16, #tpu.memory_space<vmem>>, %arg4: memref<128x128xbf16, #tpu.memory_space<vmem>>, %arg5: memref<128x128xf32, #tpu.memory_space<vmem>>, %arg6: memref<128x128xbf16, #tpu.memory_space<vmem>>, %arg7: memref<128x128xf32, #tpu.memory_space<vmem>>, %arg8: memref<128x128xf32, #tpu.memory_space<vmem>>) attributes {dimension_semantics = [#tpu.dimension_semantics<parallel>, #tpu.dimension_semantics<arbitrary>], iteration_bounds = array<i64: 1, 1>, scalar_prefetch = 0 : i64, scratch_operands = 1 : i64, tpu.core_type = #tpu.core_type<tc>, window_params = [{transform_indices = @transform_0, window_bounds = array<i64: 2>}, {transform_indices = @transform_1, window_bounds = array<i64: 128, 128>}, {transform_indices = @transform_2, window_bounds = array<i64: 128, 128>}, {transform_indices = @transform_3, window_bounds = array<i64: 128, 128>}, {transform_indices = @transform_4, window_bounds = array<i64: 128, 128>}, {transform_indices = @transform_5, window_bounds = array<i64: 128, 128>}]} {
    %c0_i32 = arith.constant 0 : i32
    %0 = arith.cmpi eq, %arg1, %c0_i32 : i32
    %1 = arith.extui %0 : i1 to i32
    %c0_i32_0 = arith.constant 0 : i32
    %2 = arith.cmpi ne, %1, %c0_i32_0 : i32
    scf.if %2 {
      %cst_10 = arith.constant 0.000000e+00 : f32
      %12 = vector.broadcast %cst_10 : f32 to vector<128x128xf32>
      %c0_11 = arith.constant 0 : index
      %c0_12 = arith.constant 0 : index
      %13 = vector.load %arg8[%c0_11, %c0_12] : memref<128x128xf32, #tpu.memory_space<vmem>>, vector<128x128xf32>
      tpu.vector_store %arg8[%c0_11, %c0_12], %12 {strides = array<i32>} : memref<128x128xf32, #tpu.memory_space<vmem>>, vector<128x128xf32>,
    } else {
    }
    %c0 = arith.constant 0 : index
    %c0_1 = arith.constant 0 : index
    %3 = vector.load %arg8[%c0, %c0_1] : memref<128x128xf32, #tpu.memory_space<vmem>>, vector<128x128xf32>
    %c0_2 = arith.constant 0 : index
    %c0_3 = arith.constant 0 : index
    %4 = vector.load %arg3[%c0_2, %c0_3] : memref<128x128xbf16, #tpu.memory_space<vmem>>, vector<128x128xbf16>
    %c0_4 = arith.constant 0 : index
    %c0_5 = arith.constant 0 : index
    %5 = vector.load %arg4[%c0_4, %c0_5] : memref<128x128xbf16, #tpu.memory_space<vmem>>, vector<128x128xbf16>
    %cst = arith.constant dense<0.000000e+00> : vector<128x128xf32>
    %6 = tpu.matmul %4, %5, %cst {dimension_numbers = #tpu.dot_dimension_numbers<[1], [0], [0], [1], [0, 0, 1, 1], [], []>} : vector<128x128xbf16>, vector<128x128xbf16>, vector<128x128xf32> -> vector<128x128xf32>
    %7 = arith.addf %3, %6 : vector<128x128xf32>
    %c0_6 = arith.constant 0 : index
    %c0_7 = arith.constant 0 : index
    %8 = vector.load %arg8[%c0_6, %c0_7] : memref<128x128xf32, #tpu.memory_space<vmem>>, vector<128x128xf32>
    tpu.vector_store %arg8[%c0_6, %c0_7], %7 {strides = array<i32>} : memref<128x128xf32, #tpu.memory_space<vmem>>, vector<128x128xf32>,
    %c0_i32_8 = arith.constant 0 : i32
    %9 = arith.cmpi eq, %arg1, %c0_i32_8 : i32
    %10 = arith.extui %9 : i1 to i32
    %c0_i32_9 = arith.constant 0 : i32
    %11 = arith.cmpi ne, %10, %c0_i32_9 : i32
    scf.if %11 {
      %c0_10 = arith.constant 0 : index
      %c0_11 = arith.constant 0 : index
      %12 = vector.load %arg8[%c0_10, %c0_11] : memref<128x128xf32, #tpu.memory_space<vmem>>, vector<128x128xf32>
      %13 = arith.truncf %12 : vector<128x128xf32> to vector<128x128xbf16>
      %c0_12 = arith.constant 0 : index
      %c0_13 = arith.constant 0 : index
      %14 = vector.load %arg6[%c0_12, %c0_13] : memref<128x128xbf16, #tpu.memory_space<vmem>>, vector<128x128xbf16>
      tpu.vector_store %arg6[%c0_12, %c0_13], %13 {strides = array<i32>} : memref<128x128xbf16, #tpu.memory_space<vmem>>, vector<128x128xbf16>,
      %c0_14 = arith.constant 0 : index
      %15 = memref.load %arg2[%c0_14] : memref<2xf32, #tpu.memory_space<smem>>
      %c0_15 = arith.constant 0 : index
      %c0_16 = arith.constant 0 : index
      %16 = vector.load %arg5[%c0_15, %c0_16] : memref<128x128xf32, #tpu.memory_space<vmem>>, vector<128x128xf32>
      %17 = vector.broadcast %15 : f32 to vector<128x128xf32>
      %18 = arith.mulf %17, %16 : vector<128x128xf32>
      %c1 = arith.constant 1 : index
      %19 = memref.load %arg2[%c1] : memref<2xf32, #tpu.memory_space<smem>>
      %20 = vector.broadcast %19 : f32 to vector<128x128xf32>
      %21 = arith.mulf %20, %12 : vector<128x128xf32>
      %22 = arith.addf %18, %21 : vector<128x128xf32>
      %c0_17 = arith.constant 0 : index
      %c0_18 = arith.constant 0 : index
      %23 = vector.load %arg7[%c0_17, %c0_18] : memref<128x128xf32, #tpu.memory_space<vmem>>, vector<128x128xf32>
      tpu.vector_store %arg7[%c0_17, %c0_18], %22 {strides = array<i32>} : memref<128x128xf32, #tpu.memory_space<vmem>>, vector<128x128xf32>,
    } else {
    }
    return
  }
  func.func @transform_0(%arg0: i32, %arg1: i32) -> i32 {
    %c0_i32 = arith.constant 0 : i32
    %c0_i32_0 = arith.constant 0 : i32
    return %c0_i32 : i32
  }
  func.func @transform_1(%arg0: i32, %arg1: i32) -> (i32, i32) {
    %c0_i32 = arith.constant 0 : i32
    return %arg0, %arg1 : i32, i32
  }
  func.func @transform_2(%arg0: i32, %arg1: i32) -> (i32, i32) {
    %c0_i32 = arith.constant 0 : i32
    %c0_i32_0 = arith.constant 0 : i32
    return %arg1, %c0_i32 : i32, i32
  }
  func.func @transform_3(%arg0: i32, %arg1: i32) -> (i32, i32) {
    %c0_i32 = arith.constant 0 : i32
    %c0_i32_0 = arith.constant 0 : i32
    return %arg0, %c0_i32 : i32, i32
  }
  func.func @transform_4(%arg0: i32, %arg1: i32) -> (i32, i32) {
    %c0_i32 = arith.constant 0 : i32
    %c0_i32_0 = arith.constant 0 : i32
    return %arg0, %c0_i32 : i32, i32
  }
  func.func @transform_5(%arg0: i32, %arg1: i32) -> (i32, i32) {
    %c0_i32 = arith.constant 0 : i32
    %c0_i32_0 = arith.constant 0 : i32
    return %arg0, %c0_i32 : i32, i32
  }
}

</mosaic_0001>

<llo_original>
// kernel: gprgnn_forward.15
$region0: #{gprgnn_forward.15}
  #allocation0 [shape = 'u32[]', space=smem, size = 0x4, offset = 0x4, fixed_abs, tag = 'smem constant byte address 0x4 - core index']
  #allocation1 [shape = 'u32[72,128]{1,0:T(1,128)}', space=vmem, size = 0x9000, scoped, tag = 'internal scratch']
  #allocation2 [shape = 'f32[128,128]{1,0:T(8,128)}', space=vmem, size = 0x10000, scoped, tag = 'scratch operand']
  %s0 = inlined_call_operand.vmem [shape: f32[128,128], index: 0, kind: input, shape index: {}]
  %s1 = inlined_call_operand.vmem [shape: f32[128,128], index: 1, kind: input, shape index: {}]
  %s2 = inlined_call_operand.vmem [shape: f32[1,128], index: 2, kind: input, shape index: {}]
  %s3 = inlined_call_operand.vmem [shape: f32[128,128], index: 3, kind: output, shape index: {}]
  %s4 = sld [smem:[#allocation0]]
  $region30: #{gprgnn_forward.15} parent=0
    _
  %s6 = ssub.s32 1, %s4
  %s7 = scalar_select 0, %s6, %s4
  // Predicated region
  $region2: #{gprgnn_forward.15} parent=0 // pred_check
    _
  $region3: #{gprgnn_forward.15} parent=0 // pred_check_branch
    %9 = sbr.rel (0) target = $region5
  $region4: #{gprgnn_forward.15} parent=0 // pred_region
    _
  $region5: #{gprgnn_forward.15} parent=0 // pred_fallthru
    _
  // Predicated region
  $region6: #{gprgnn_forward.15} parent=0 // pred_check
    _
  $region7: #{gprgnn_forward.15} parent=0 // pred_check_branch
    %11 = sbr.rel (0) target = $region9
  $region8: #{gprgnn_forward.15} parent=0 // pred_region
    _
  $region9: #{gprgnn_forward.15} parent=0 // pred_fallthru
    _
  // Predicated region
  $region10: #{gprgnn_forward.15} parent=0 // pred_check
    _
  $region11: #{gprgnn_forward.15} parent=0 // pred_check_branch
    %13 = sbr.rel (0) target = $region13
  $region12: #{gprgnn_forward.15} parent=0 // pred_region
    _
  $region13: #{gprgnn_forward.15} parent=0 // pred_fallthru
    _
  %p14 = scmp.eq.s32.totalorder 0, 0
  // Predicated region
  $region14: #{gprgnn_forward.15} parent=0 // pred_check
    %p15 = pneg %p14
  $region15: #{gprgnn_forward.15} parent=0 // pred_check_branch
    %17 = sbr.rel (%p15) target = $region17
  $region16: #{gprgnn_forward.15} parent=0 // pred_region
    %18 = vst [vmem:[#allocation2] sm:$0xff] 0.0
    %19 = vst [vmem:[#allocation2 + $0x8] sm:$0xff] 0.0
    %20 = vst [vmem:[#allocation2 + $0x10] sm:$0xff] 0.0
    %21 = vst [vmem:[#allocation2 + $0x18] sm:$0xff] 0.0
    %22 = vst [vmem:[#allocation2 + $0x20] sm:$0xff] 0.0
    %23 = vst [vmem:[#allocation2 + $0x28] sm:$0xff] 0.0
    %24 = vst [vmem:[#allocation2 + $0x30] sm:$0xff] 0.0
    %25 = vst [vmem:[#allocation2 + $0x38] sm:$0xff] 0.0
    %26 = vst [vmem:[#allocation2 + $0x40] sm:$0xff] 0.0
    %27 = vst [vmem:[#allocation2 + $0x48] sm:$0xff] 0.0
    %28 = vst [vmem:[#allocation2 + $0x50] sm:$0xff] 0.0
    %29 = vst [vmem:[#allocation2 + $0x58] sm:$0xff] 0.0
    %30 = vst [vmem:[#allocation2 + $0x60] sm:$0xff] 0.0
    %31 = vst [vmem:[#allocation2 + $0x68] sm:$0xff] 0.0
    %32 = vst [vmem:[#allocation2 + $0x70] sm:$0xff] 0.0
    %33 = vst [vmem:[#allocation2 + $0x78] sm:$0xff] 0.0
  $region17: #{gprgnn_forward.15} parent=0 // pred_fallthru
    _
  %v34 = vld [vmem:[#allocation2] sm:$0xff]
  %v35 = vld [vmem:[#allocation2 + $0x8] sm:$0xff]
  %v36 = vld [vmem:[#allocation2 + $0x10] sm:$0xff]
  %v37 = vld [vmem:[#allocation2 + $0x18] sm:$0xff]
  %v38 = vld [vmem:[#allocation2 + $0x20] sm:$0xff]
  %v39 = vld [vmem:[#allocation2 + $0x28] sm:$0xff]
  %v40 = vld [vmem:[#allocation2 + $0x30] sm:$0xff]
  %v41 = vld [vmem:[#allocation2 + $0x38] sm:$0xff]
  %v42 = vld [vmem:[#allocation2 + $0x40] sm:$0xff]
  %v43 = vld [vmem:[#allocation2 + $0x48] sm:$0xff]
  %v44 = vld [vmem:[#allocation2 + $0x50] sm:$0xff]
  %v45 = vld [vmem:[#allocation2 + $0x58] sm:$0xff]
  %v46 = vld [vmem:[#allocation2 + $0x60] sm:$0xff]
  %v47 = vld [vmem:[#allocation2 + $0x68] sm:$0xff]
  %v48 = vld [vmem:[#allocation2 + $0x70] sm:$0xff]
  %v49 = vld [vmem:[#allocation2 + $0x78] sm:$0xff]
  %v50 = vld [vmem:[%s0] sm:$0xff]
  %v51 = vld [vmem:[%s0 + $0x8] sm:$0xff]
  %v52 = vld [vmem:[%s0 + $0x10] sm:$0xff]
  %v53 = vld [vmem:[%s0 + $0x18] sm:$0xff]
  %v54 = vld [vmem:[%s0 + $0x20] sm:$0xff]
  %v55 = vld [vmem:[%s0 + $0x28] sm:$0xff]
  %v56 = vld [vmem:[%s0 + $0x30] sm:$0xff]
  %v57 = vld [vmem:[%s0 + $0x38] sm:$0xff]
  %v58 = vld [vmem:[%s0 + $0x40] sm:$0xff]
  %v59 = vld [vmem:[%s0 + $0x48] sm:$0xff]
  %v60 = vld [vmem:[%s0 + $0x50] sm:$0xff]
  %v61 = vld [vmem:[%s0 + $0x58] sm:$0xff]
  %v62 = vld [vmem:[%s0 + $0x60] sm:$0xff]
  %v63 = vld [vmem:[%s0 + $0x68] sm:$0xff]
  %v64 = vld [vmem:[%s0 + $0x70] sm:$0xff]
  %v65 = vld [vmem:[%s0 + $0x78] sm:$0xff]
  %v66 = vld [vmem:[%s1] sm:$0xff]
  %v67 = vld [vmem:[%s1 + $0x8] sm:$0xff]
  %v68 = vld [vmem:[%s1 + $0x10] sm:$0xff]
  %v69 = vld [vmem:[%s1 + $0x18] sm:$0xff]
  %v70 = vld [vmem:[%s1 + $0x20] sm:$0xff]
  %v71 = vld [vmem:[%s1 + $0x28] sm:$0xff]
  %v72 = vld [vmem:[%s1 + $0x30] sm:$0xff]
  %v73 = vld [vmem:[%s1 + $0x38] sm:$0xff]
  %v74 = vld [vmem:[%s1 + $0x40] sm:$0xff]
  %v75 = vld [vmem:[%s1 + $0x48] sm:$0xff]
  %v76 = vld [vmem:[%s1 + $0x50] sm:$0xff]
  %v77 = vld [vmem:[%s1 + $0x58] sm:$0xff]
  %v78 = vld [vmem:[%s1 + $0x60] sm:$0xff]
  %v79 = vld [vmem:[%s1 + $0x68] sm:$0xff]
  %v80 = vld [vmem:[%s1 + $0x70] sm:$0xff]
  %v81 = vld [vmem:[%s1 + $0x78] sm:$0xff]
  %82 = vmatpush.msra.mxu0 %v81
  %83 = vmatpush.msra.mxu0 %v80
  %84 = vmatpush.msra.mxu0 %v79
  %85 = vmatpush.msra.mxu0 %v78
  %86 = vmatpush.msra.mxu0 %v77
  %87 = vmatpush.msra.mxu0 %v76
  %88 = vmatpush.msra.mxu0 %v75
  %89 = vmatpush.msra.mxu0 %v74
  %90 = vmatpush.msra.mxu0 %v73
  %91 = vmatpush.msra.mxu0 %v72
  %92 = vmatpush.msra.mxu0 %v71
  %93 = vmatpush.msra.mxu0 %v70
  %94 = vmatpush.msra.mxu0 %v69
  %95 = vmatpush.msra.mxu0 %v68
  %96 = vmatpush.msra.mxu0 %v67
  %97 = vmatpush.msra.mxu0 %v66
  %98 = vmatmul.f32.gmra.mxu0 %v50
  %v99 = vpop.f32.mrf.mxu0
  %v100 = vadd.f32 0.0, %v99
  %101 = vmatmul.f32.gmra.mxu0 %v51
  %v102 = vpop.f32.mrf.mxu0
  %v103 = vadd.f32 0.0, %v102
  %104 = vmatmul.f32.gmra.mxu0 %v52
  %v105 = vpop.f32.mrf.mxu0
  %v106 = vadd.f32 0.0, %v105
  %107 = vmatmul.f32.gmra.mxu0 %v53
  %v108 = vpop.f32.mrf.mxu0
  %v109 = vadd.f32 0.0, %v108
  %110 = vmatmul.f32.gmra.mxu0 %v54
  %v111 = vpop.f32.mrf.mxu0
  %v112 = vadd.f32 0.0, %v111
  %113 = vmatmul.f32.gmra.mxu0 %v55
  %v114 = vpop.f32.mrf.mxu0
  %v115 = vadd.f32 0.0, %v114
  %116 = vmatmul.f32.gmra.mxu0 %v56
  %v117 = vpop.f32.mrf.mxu0
  %v118 = vadd.f32 0.0, %v117
  %119 = vmatmul.f32.gmra.mxu0 %v57
  %v120 = vpop.f32.mrf.mxu0
  %v121 = vadd.f32 0.0, %v120
  %122 = vmatmul.f32.gmra.mxu0 %v58
  %v123 = vpop.f32.mrf.mxu0
  %v124 = vadd.f32 0.0, %v123
  %125 = vmatmul.f32.gmra.mxu0 %v59
  %v126 = vpop.f32.mrf.mxu0
  %v127 = vadd.f32 0.0, %v126
  %128 = vmatmul.f32.gmra.mxu0 %v60
  %v129 = vpop.f32.mrf.mxu0
  %v130 = vadd.f32 0.0, %v129
  %131 = vmatmul.f32.gmra.mxu0 %v61
  %v132 = vpop.f32.mrf.mxu0
  %v133 = vadd.f32 0.0, %v132
  %134 = vmatmul.f32.gmra.mxu0 %v62
  %v135 = vpop.f32.mrf.mxu0
  %v136 = vadd.f32 0.0, %v135
  %137 = vmatmul.f32.gmra.mxu0 %v63
  %v138 = vpop.f32.mrf.mxu0
  %v139 = vadd.f32 0.0, %v138
  %140 = vmatmul.f32.gmra.mxu0 %v64
  %v141 = vpop.f32.mrf.mxu0
  %v142 = vadd.f32 0.0, %v141
  %143 = vmatmul.f32.gmra.mxu0 %v65
  %v144 = vpop.f32.mrf.mxu0
  %v145 = vadd.f32 0.0, %v144
  %146 = vdwg.mxu0
  %v147 = vadd.f32 %v34, %v100
  %v148 = vadd.f32 %v35, %v103
  %v149 = vadd.f32 %v36, %v106
  %v150 = vadd.f32 %v37, %v109
  %v151 = vadd.f32 %v38, %v112
  %v152 = vadd.f32 %v39, %v115
  %v153 = vadd.f32 %v40, %v118
  %v154 = vadd.f32 %v41, %v121
  %v155 = vadd.f32 %v42, %v124
  %v156 = vadd.f32 %v43, %v127
  %v157 = vadd.f32 %v44, %v130
  %v158 = vadd.f32 %v45, %v133
  %v159 = vadd.f32 %v46, %v136
  %v160 = vadd.f32 %v47, %v139
  %v161 = vadd.f32 %v48, %v142
  %v162 = vadd.f32 %v49, %v145
  %163 = vst [vmem:[#allocation2] sm:$0xff] %v147
  %164 = vst [vmem:[#allocation2 + $0x8] sm:$0xff] %v148
  %165 = vst [vmem:[#allocation2 + $0x10] sm:$0xff] %v149
  %166 = vst [vmem:[#allocation2 + $0x18] sm:$0xff] %v150
  %167 = vst [vmem:[#allocation2 + $0x20] sm:$0xff] %v151
  %168 = vst [vmem:[#allocation2 + $0x28] sm:$0xff] %v152
  %169 = vst [vmem:[#allocation2 + $0x30] sm:$0xff] %v153
  %170 = vst [vmem:[#allocation2 + $0x38] sm:$0xff] %v154
  %171 = vst [vmem:[#allocation2 + $0x40] sm:$0xff] %v155
  %172 = vst [vmem:[#allocation2 + $0x48] sm:$0xff] %v156
  %173 = vst [vmem:[#allocation2 + $0x50] sm:$0xff] %v157
  %174 = vst [vmem:[#allocation2 + $0x58] sm:$0xff] %v158
  %175 = vst [vmem:[#allocation2 + $0x60] sm:$0xff] %v159
  %176 = vst [vmem:[#allocation2 + $0x68] sm:$0xff] %v160
  %177 = vst [vmem:[#allocation2 + $0x70] sm:$0xff] %v161
  %178 = vst [vmem:[#allocation2 + $0x78] sm:$0xff] %v162
  // Predicated region
  $region18: #{gprgnn_forward.15} parent=0 // pred_check
    %p179 = pneg %p14
  $region19: #{gprgnn_forward.15} parent=0 // pred_check_branch
    %181 = sbr.rel (%p179) target = $region21
  $region20: #{gprgnn_forward.15} parent=0 // pred_region
    %v182 = vld [vmem:[#allocation2] sm:$0xff]
    %v183 = vld [vmem:[#allocation2 + $0x8] sm:$0xff]
    %v184 = vld [vmem:[#allocation2 + $0x10] sm:$0xff]
    %v185 = vld [vmem:[#allocation2 + $0x18] sm:$0xff]
    %v186 = vld [vmem:[#allocation2 + $0x20] sm:$0xff]
    %v187 = vld [vmem:[#allocation2 + $0x28] sm:$0xff]
    %v188 = vld [vmem:[#allocation2 + $0x30] sm:$0xff]
    %v189 = vld [vmem:[#allocation2 + $0x38] sm:$0xff]
    %v190 = vld [vmem:[#allocation2 + $0x40] sm:$0xff]
    %v191 = vld [vmem:[#allocation2 + $0x48] sm:$0xff]
    %v192 = vld [vmem:[#allocation2 + $0x50] sm:$0xff]
    %v193 = vld [vmem:[#allocation2 + $0x58] sm:$0xff]
    %v194 = vld [vmem:[#allocation2 + $0x60] sm:$0xff]
    %v195 = vld [vmem:[#allocation2 + $0x68] sm:$0xff]
    %v196 = vld [vmem:[#allocation2 + $0x70] sm:$0xff]
    %v197 = vld [vmem:[#allocation2 + $0x78] sm:$0xff]
    %v198 = vld [vmem:[%s2] sm:$0x1]
    %v200 = vperm.slane %v198, 0
    %v202 = vadd.f32 %v182, %v200
    %v203 = vadd.f32 %v183, %v200
    %v204 = vadd.f32 %v184, %v200
    %v205 = vadd.f32 %v185, %v200
    %v206 = vadd.f32 %v186, %v200
    %v207 = vadd.f32 %v187, %v200
    %v208 = vadd.f32 %v188, %v200
    %v209 = vadd.f32 %v189, %v200
    %v210 = vadd.f32 %v190, %v200
    %v211 = vadd.f32 %v191, %v200
    %v212 = vadd.f32 %v192, %v200
    %v213 = vadd.f32 %v193, %v200
    %v214 = vadd.f32 %v194, %v200
    %v215 = vadd.f32 %v195, %v200
    %v216 = vadd.f32 %v196, %v200
    %v217 = vadd.f32 %v197, %v200
    %218 = vst [vmem:[%s3] sm:$0xff] %v202
    %219 = vst [vmem:[%s3 + $0x8] sm:$0xff] %v203
    %220 = vst [vmem:[%s3 + $0x10] sm:$0xff] %v204
    %221 = vst [vmem:[%s3 + $0x18] sm:$0xff] %v205
    %222 = vst [vmem:[%s3 + $0x20] sm:$0xff] %v206
    %223 = vst [vmem:[%s3 + $0x28] sm:$0xff] %v207
    %224 = vst [vmem:[%s3 + $0x30] sm:$0xff] %v208
    %225 = vst [vmem:[%s3 + $0x38] sm:$0xff] %v209
    %226 = vst [vmem:[%s3 + $0x40] sm:$0xff] %v210
    %227 = vst [vmem:[%s3 + $0x48] sm:$0xff] %v211
    %228 = vst [vmem:[%s3 + $0x50] sm:$0xff] %v212
    %229 = vst [vmem:[%s3 + $0x58] sm:$0xff] %v213
    %230 = vst [vmem:[%s3 + $0x60] sm:$0xff] %v214
    %231 = vst [vmem:[%s3 + $0x68] sm:$0xff] %v215
    %232 = vst [vmem:[%s3 + $0x70] sm:$0xff] %v216
    %233 = vst [vmem:[%s3 + $0x78] sm:$0xff] %v217
  $region21: #{gprgnn_forward.15} parent=0 // pred_fallthru
    _
  // Predicated region
  $region22: #{gprgnn_forward.15} parent=0 // pred_check
    _
  $region23: #{gprgnn_forward.15} parent=0 // pred_check_branch
    %235 = sbr.rel (0) target = $region25
  $region24: #{gprgnn_forward.15} parent=0 // pred_region
    _
  $region25: #{gprgnn_forward.15} parent=0 // pred_fallthru
    _
  // Predicated region
  $region26: #{gprgnn_forward.15} parent=0 // pred_check
    _
  $region27: #{gprgnn_forward.15} parent=0 // pred_check_branch
    %237 = sbr.rel (0) target = $region29
  $region28: #{gprgnn_forward.15} parent=0 // pred_region
    _
  $region29: #{gprgnn_forward.15} parent=0 // pred_fallthru
    _

// kernel: gprgnn_forward.16
$region0: #{gprgnn_forward.16}
  #allocation0 [shape = 'u32[]', space=smem, size = 0x4, offset = 0x4, fixed_abs, tag = 'smem constant byte address 0x4 - core index']
  #allocation1 [shape = 'u32[72,128]{1,0:T(1,128)}', space=vmem, size = 0x9000, scoped, tag = 'internal scratch']
  #allocation2 [shape = 'f32[128,128]{1,0:T(8,128)}', space=vmem, size = 0x10000, scoped, tag = 'scratch operand']
  %s0 = inlined_call_operand.vmem [shape: f32[2], index: 0, kind: input, shape index: {}]
  %s1 = inlined_call_operand.vmem [shape: bf16[128,128], index: 1, kind: input, shape index: {}]
  %s2 = inlined_call_operand.vmem [shape: bf16[128,128], index: 2, kind: input, shape index: {}]
  %s3 = inlined_call_operand.vmem [shape: f32[128,128], index: 3, kind: input, shape index: {}]
  %s4 = inlined_call_operand.vmem [shape: bf16[128,128], index: 4, kind: output, shape index: {0}]
  %s5 = inlined_call_operand.vmem [shape: f32[128,128], index: 5, kind: output, shape index: {1}]
  %6 = xla_tuple %s4, %s5
  %s7 = sld [smem:[#allocation0]]
  $region46: #{gprgnn_forward.16} parent=0
    _
  %s9 = ssub.s32 1, %s7
  %s10 = scalar_select 0, %s9, %s7
  $region1: #{gprgnn_forward.16} parent=0
    #allocation3 [shape = 'u8[512]{0}', space=smem, size = 0x200, scoped, tag = 'input window, operand 0, single buffered']
    #allocation4 [shape = 's32[1]{0}', space=sflag, size = 0x4, scoped, tag = 'scoped memory for gprgnn_forward.16']
    %11 = vsyncpa [#allocation4], 0
    // Predicated region
    $region2: #{gprgnn_forward.16} parent=1 // pred_check
      _
    $region3: #{gprgnn_forward.16} parent=1 // pred_check_branch
      %13 = sbr.rel (0) target = $region5
    $region4: #{gprgnn_forward.16} parent=1 // pred_region
      %15 = vsyncadd [#allocation4], 0
      %s17 = sshll.u32 %s0, 4
      %s18 = int_to_ptr.vmem [resolvable:$true] %s17
      %20 = dma.vmem_to_smem %s18, 16, [#allocation3], [#allocation4]
    $region5: #{gprgnn_forward.16} parent=1 // pred_fallthru
      _
    // Predicated region
    $region6: #{gprgnn_forward.16} parent=1 // pred_check
      _
    $region7: #{gprgnn_forward.16} parent=1 // pred_check_branch
      %22 = sbr.rel (0) target = $region9
    $region8: #{gprgnn_forward.16} parent=1 // pred_region
      _
    $region9: #{gprgnn_forward.16} parent=1 // pred_fallthru
      _
    // Predicated region
    $region10: #{gprgnn_forward.16} parent=1 // pred_check
      _
    $region11: #{gprgnn_forward.16} parent=1 // pred_check_branch
      %24 = sbr.rel (0) target = $region13
    $region12: #{gprgnn_forward.16} parent=1 // pred_region
      _
    $region13: #{gprgnn_forward.16} parent=1 // pred_fallthru
      _
    // Predicated region
    $region14: #{gprgnn_forward.16} parent=1 // pred_check
      _
    $region15: #{gprgnn_forward.16} parent=1 // pred_check_branch
      %26 = sbr.rel (0) target = $region17
    $region16: #{gprgnn_forward.16} parent=1 // pred_region
      _
    $region17: #{gprgnn_forward.16} parent=1 // pred_fallthru
      _
    // Predicated region
    $region18: #{gprgnn_forward.16} parent=1 // pred_check
      _
    $region19: #{gprgnn_forward.16} parent=1 // pred_check_branch
      %28 = sbr.rel (0) target = $region21
    $region20: #{gprgnn_forward.16} parent=1 // pred_region
      %30 = dma.done [#allocation4], 16
    $region21: #{gprgnn_forward.16} parent=1 // pred_fallthru
      _
    %31 = sfence
    %p32 = scmp.eq.s32.totalorder 0, 0
    // Predicated region
    $region22: #{gprgnn_forward.16} parent=1 // pred_check
      %p33 = pneg %p32
    $region23: #{gprgnn_forward.16} parent=1 // pred_check_branch
      %35 = sbr.rel (%p33) target = $region25
    $region24: #{gprgnn_forward.16} parent=1 // pred_region
      %36 = vst [vmem:[#allocation2] sm:$0xff] 0.0
      %37 = vst [vmem:[#allocation2 + $0x8] sm:$0xff] 0.0
      %38 = vst [vmem:[#allocation2 + $0x10] sm:$0xff] 0.0
      %39 = vst [vmem:[#allocation2 + $0x18] sm:$0xff] 0.0
      %40 = vst [vmem:[#allocation2 + $0x20] sm:$0xff] 0.0
      %41 = vst [vmem:[#allocation2 + $0x28] sm:$0xff] 0.0
      %42 = vst [vmem:[#allocation2 + $0x30] sm:$0xff] 0.0
      %43 = vst [vmem:[#allocation2 + $0x38] sm:$0xff] 0.0
      %44 = vst [vmem:[#allocation2 + $0x40] sm:$0xff] 0.0
      %45 = vst [vmem:[#allocation2 + $0x48] sm:$0xff] 0.0
      %46 = vst [vmem:[#allocation2 + $0x50] sm:$0xff] 0.0
      %47 = vst [vmem:[#allocation2 + $0x58] sm:$0xff] 0.0
      %48 = vst [vmem:[#allocation2 + $0x60] sm:$0xff] 0.0
      %49 = vst [vmem:[#allocation2 + $0x68] sm:$0xff] 0.0
      %50 = vst [vmem:[#allocation2 + $0x70] sm:$0xff] 0.0
      %51 = vst [vmem:[#allocation2 + $0x78] sm:$0xff] 0.0
    $region25: #{gprgnn_forward.16} parent=1 // pred_fallthru
      _
    %v52 = vld [vmem:[#allocation2] sm:$0xff]
    %v53 = vld [vmem:[#allocation2 + $0x8] sm:$0xff]
    %v54 = vld [vmem:[#allocation2 + $0x10] sm:$0xff]
    %v55 = vld [vmem:[#allocation2 + $0x18] sm:$0xff]
    %v56 = vld [vmem:[#allocation2 + $0x20] sm:$0xff]
    %v57 = vld [vmem:[#allocation2 + $0x28] sm:$0xff]
    %v58 = vld [vmem:[#allocation2 + $0x30] sm:$0xff]
    %v59 = vld [vmem:[#allocation2 + $0x38] sm:$0xff]
    %v60 = vld [vmem:[#allocation2 + $0x40] sm:$0xff]
    %v61 = vld [vmem:[#allocation2 + $0x48] sm:$0xff]
    %v62 = vld [vmem:[#allocation2 + $0x50] sm:$0xff]
    %v63 = vld [vmem:[#allocation2 + $0x58] sm:$0xff]
    %v64 = vld [vmem:[#allocation2 + $0x60] sm:$0xff]
    %v65 = vld [vmem:[#allocation2 + $0x68] sm:$0xff]
    %v66 = vld [vmem:[#allocation2 + $0x70] sm:$0xff]
    %v67 = vld [vmem:[#allocation2 + $0x78] sm:$0xff]
    %v68 = vld [vmem:[%s1] sm:$0xf]
    %v69 = vld [vmem:[%s1 + $0x4] sm:$0xf]
    %v70 = vld [vmem:[%s1 + $0x8] sm:$0xf]
    %v71 = vld [vmem:[%s1 + $0xc] sm:$0xf]
    %v72 = vld [vmem:[%s1 + $0x10] sm:$0xf]
    %v73 = vld [vmem:[%s1 + $0x14] sm:$0xf]
    %v74 = vld [vmem:[%s1 + $0x18] sm:$0xf]
    %v75 = vld [vmem:[%s1 + $0x1c] sm:$0xf]
    %v76 = vld [vmem:[%s1 + $0x20] sm:$0xf]
    %v77 = vld [vmem:[%s1 + $0x24] sm:$0xf]
    %v78 = vld [vmem:[%s1 + $0x28] sm:$0xf]
    %v79 = vld [vmem:[%s1 + $0x2c] sm:$0xf]
    %v80 = vld [vmem:[%s1 + $0x30] sm:$0xf]
    %v81 = vld [vmem:[%s1 + $0x34] sm:$0xf]
    %v82 = vld [vmem:[%s1 + $0x38] sm:$0xf]
    %v83 = vld [vmem:[%s1 + $0x3c] sm:$0xf]
    %v84 = vld [vmem:[%s2] sm:$0xf]
    %v85 = vld [vmem:[%s2 + $0x4] sm:$0xf]
    %v86 = vld [vmem:[%s2 + $0x8] sm:$0xf]
    %v87 = vld [vmem:[%s2 + $0xc] sm:$0xf]
    %v88 = vld [vmem:[%s2 + $0x10] sm:$0xf]
    %v89 = vld [vmem:[%s2 + $0x14] sm:$0xf]
    %v90 = vld [vmem:[%s2 + $0x18] sm:$0xf]
    %v91 = vld [vmem:[%s2 + $0x1c] sm:$0xf]
    %v92 = vld [vmem:[%s2 + $0x20] sm:$0xf]
    %v93 = vld [vmem:[%s2 + $0x24] sm:$0xf]
    %v94 = vld [vmem:[%s2 + $0x28] sm:$0xf]
    %v95 = vld [vmem:[%s2 + $0x2c] sm:$0xf]
    %v96 = vld [vmem:[%s2 + $0x30] sm:$0xf]
    %v97 = vld [vmem:[%s2 + $0x34] sm:$0xf]
    %v98 = vld [vmem:[%s2 + $0x38] sm:$0xf]
    %v99 = vld [vmem:[%s2 + $0x3c] sm:$0xf]
    %v116 = vunpack.c.l.b16 %v68
    %v117 = vunpack.c.l.b16 %v69
    %v118 = vunpack.c.l.b16 %v70
    %v119 = vunpack.c.l.b16 %v71
    %v120 = vunpack.c.l.b16 %v72
    %v121 = vunpack.c.l.b16 %v73
    %v122 = vunpack.c.l.b16 %v74
    %v123 = vunpack.c.l.b16 %v75
    %v124 = vunpack.c.l.b16 %v76
    %v125 = vunpack.c.l.b16 %v77
    %v126 = vunpack.c.l.b16 %v78
    %v127 = vunpack.c.l.b16 %v79
    %v128 = vunpack.c.l.b16 %v80
    %v129 = vunpack.c.l.b16 %v81
    %v130 = vunpack.c.l.b16 %v82
    %v131 = vunpack.c.l.b16 %v83
    %v132 = vpack.c.b16 %v117, %v116
    %v133 = vpack.c.b16 %v119, %v118
    %v134 = vpack.c.b16 %v121, %v120
    %v135 = vpack.c.b16 %v123, %v122
    %v136 = vpack.c.b16 %v125, %v124
    %v137 = vpack.c.b16 %v127, %v126
    %v138 = vpack.c.b16 %v129, %v128
    %v139 = vpack.c.b16 %v131, %v130
    %v164 = vunpack.c.l.b16 %v84
    %v165 = vunpack.c.l.b16 %v85
    %v166 = vunpack.c.l.b16 %v86
    %v167 = vunpack.c.l.b16 %v87
    %v168 = vunpack.c.l.b16 %v88
    %v169 = vunpack.c.l.b16 %v89
    %v170 = vunpack.c.l.b16 %v90
    %v171 = vunpack.c.l.b16 %v91
    %v172 = vunpack.c.l.b16 %v92
    %v173 = vunpack.c.l.b16 %v93
    %v174 = vunpack.c.l.b16 %v94
    %v175 = vunpack.c.l.b16 %v95
    %v176 = vunpack.c.l.b16 %v96
    %v177 = vunpack.c.l.b16 %v97
    %v178 = vunpack.c.l.b16 %v98
    %v179 = vunpack.c.l.b16 %v99
    %v180 = vpack.c.b16 %v165, %v164
    %v181 = vpack.c.b16 %v167, %v166
    %v182 = vpack.c.b16 %v169, %v168
    %v183 = vpack.c.b16 %v171, %v170
    %v184 = vpack.c.b16 %v173, %v172
    %v185 = vpack.c.b16 %v175, %v174
    %v186 = vpack.c.b16 %v177, %v176
    %v187 = vpack.c.b16 %v179, %v178
    %196 = vmatpush.bf16.msra.mxu0 %v187
    %197 = vmatpush.bf16.msra.mxu0 %v186
    %198 = vmatpush.bf16.msra.mxu0 %v185
    %199 = vmatpush.bf16.msra.mxu0 %v184
    %200 = vmatpush.bf16.msra.mxu0 %v183
    %201 = vmatpush.bf16.msra.mxu0 %v182
    %202 = vmatpush.bf16.msra.mxu0 %v181
    %203 = vmatpush.bf16.msra.mxu0 %v180
    %204 = vmatmul.bf16.gmra.mxu0 %v132
    %v205 = vpop.f32.mrf.mxu0
    %v206 = vadd.f32 0.0, %v205
    %v207 = vpop.f32.mrf.mxu0
    %v208 = vadd.f32 0.0, %v207
    %209 = vmatmul.bf16.gmra.mxu0 %v133
    %v210 = vpop.f32.mrf.mxu0
    %v211 = vadd.f32 0.0, %v210
    %v212 = vpop.f32.mrf.mxu0
    %v213 = vadd.f32 0.0, %v212
    %214 = vmatmul.bf16.gmra.mxu0 %v134
    %v215 = vpop.f32.mrf.mxu0
    %v216 = vadd.f32 0.0, %v215
    %v217 = vpop.f32.mrf.mxu0
    %v218 = vadd.f32 0.0, %v217
    %219 = vmatmul.bf16.gmra.mxu0 %v135
    %v220 = vpop.f32.mrf.mxu0
    %v221 = vadd.f32 0.0, %v220
    %v222 = vpop.f32.mrf.mxu0
    %v223 = vadd.f32 0.0, %v222
    %224 = vmatmul.bf16.gmra.mxu0 %v136
    %v225 = vpop.f32.mrf.mxu0
    %v226 = vadd.f32 0.0, %v225
    %v227 = vpop.f32.mrf.mxu0
    %v228 = vadd.f32 0.0, %v227
    %229 = vmatmul.bf16.gmra.mxu0 %v137
    %v230 = vpop.f32.mrf.mxu0
    %v231 = vadd.f32 0.0, %v230
    %v232 = vpop.f32.mrf.mxu0
    %v233 = vadd.f32 0.0, %v232
    %234 = vmatmul.bf16.gmra.mxu0 %v138
    %v235 = vpop.f32.mrf.mxu0
    %v236 = vadd.f32 0.0, %v235
    %v237 = vpop.f32.mrf.mxu0
    %v238 = vadd.f32 0.0, %v237
    %239 = vmatmul.bf16.gmra.mxu0 %v139
    %v240 = vpop.f32.mrf.mxu0
    %v241 = vadd.f32 0.0, %v240
    %v242 = vpop.f32.mrf.mxu0
    %v243 = vadd.f32 0.0, %v242
    %244 = vdwg.mxu0
    %v245 = vadd.f32 %v52, %v206
    %v246 = vadd.f32 %v53, %v208
    %v247 = vadd.f32 %v54, %v211
    %v248 = vadd.f32 %v55, %v213
    %v249 = vadd.f32 %v56, %v216
    %v250 = vadd.f32 %v57, %v218
    %v251 = vadd.f32 %v58, %v221
    %v252 = vadd.f32 %v59, %v223
    %v253 = vadd.f32 %v60, %v226
    %v254 = vadd.f32 %v61, %v228
    %v255 = vadd.f32 %v62, %v231
    %v256 = vadd.f32 %v63, %v233
    %v257 = vadd.f32 %v64, %v236
    %v258 = vadd.f32 %v65, %v238
    %v259 = vadd.f32 %v66, %v241
    %v260 = vadd.f32 %v67, %v243
    %261 = vst [vmem:[#allocation2] sm:$0xff] %v245
    %262 = vst [vmem:[#allocation2 + $0x8] sm:$0xff] %v246
    %263 = vst [vmem:[#allocation2 + $0x10] sm:$0xff] %v247
    %264 = vst [vmem:[#allocation2 + $0x18] sm:$0xff] %v248
    %265 = vst [vmem:[#allocation2 + $0x20] sm:$0xff] %v249
    %266 = vst [vmem:[#allocation2 + $0x28] sm:$0xff] %v250
    %267 = vst [vmem:[#allocation2 + $0x30] sm:$0xff] %v251
    %268 = vst [vmem:[#allocation2 + $0x38] sm:$0xff] %v252
    %269 = vst [vmem:[#allocation2 + $0x40] sm:$0xff] %v253
    %270 = vst [vmem:[#allocation2 + $0x48] sm:$0xff] %v254
    %271 = vst [vmem:[#allocation2 + $0x50] sm:$0xff] %v255
    %272 = vst [vmem:[#allocation2 + $0x58] sm:$0xff] %v256
    %273 = vst [vmem:[#allocation2 + $0x60] sm:$0xff] %v257
    %274 = vst [vmem:[#allocation2 + $0x68] sm:$0xff] %v258
    %275 = vst [vmem:[#allocation2 + $0x70] sm:$0xff] %v259
    %276 = vst [vmem:[#allocation2 + $0x78] sm:$0xff] %v260
    // Predicated region
    $region26: #{gprgnn_forward.16} parent=1 // pred_check
      %p277 = pneg %p32
    $region27: #{gprgnn_forward.16} parent=1 // pred_check_branch
      %279 = sbr.rel (%p277) target = $region29
    $region28: #{gprgnn_forward.16} parent=1 // pred_region
      %v280 = vld [vmem:[#allocation2] sm:$0xff]
      %v281 = vld [vmem:[#allocation2 + $0x8] sm:$0xff]
      %v282 = vld [vmem:[#allocation2 + $0x10] sm:$0xff]
      %v283 = vld [vmem:[#allocation2 + $0x18] sm:$0xff]
      %v284 = vld [vmem:[#allocation2 + $0x20] sm:$0xff]
      %v285 = vld [vmem:[#allocation2 + $0x28] sm:$0xff]
      %v286 = vld [vmem:[#allocation2 + $0x30] sm:$0xff]
      %v287 = vld [vmem:[#allocation2 + $0x38] sm:$0xff]
      %v288 = vld [vmem:[#allocation2 + $0x40] sm:$0xff]
      %v289 = vld [vmem:[#allocation2 + $0x48] sm:$0xff]
      %v290 = vld [vmem:[#allocation2 + $0x50] sm:$0xff]
      %v291 = vld [vmem:[#allocation2 + $0x58] sm:$0xff]
      %v292 = vld [vmem:[#allocation2 + $0x60] sm:$0xff]
      %v293 = vld [vmem:[#allocation2 + $0x68] sm:$0xff]
      %v294 = vld [vmem:[#allocation2 + $0x70] sm:$0xff]
      %v295 = vld [vmem:[#allocation2 + $0x78] sm:$0xff]
      %v296 = vpack.c.bf16 %v280, %v280
      %v297 = vpack.c.bf16 %v281, %v281
      %v298 = vpack.c.bf16 %v282, %v282
      %v299 = vpack.c.bf16 %v283, %v283
      %v300 = vpack.c.bf16 %v284, %v284
      %v301 = vpack.c.bf16 %v285, %v285
      %v302 = vpack.c.bf16 %v286, %v286
      %v303 = vpack.c.bf16 %v287, %v287
      %v304 = vpack.c.bf16 %v288, %v288
      %v305 = vpack.c.bf16 %v289, %v289
      %v306 = vpack.c.bf16 %v290, %v290
      %v307 = vpack.c.bf16 %v291, %v291
      %v308 = vpack.c.bf16 %v292, %v292
      %v309 = vpack.c.bf16 %v293, %v293
      %v310 = vpack.c.bf16 %v294, %v294
      %v311 = vpack.c.bf16 %v295, %v295
      %312 = vst [vmem:[%s4] sm:$0xf] %v296
      %313 = vst [vmem:[%s4 + $0x4] sm:$0xf] %v297
      %314 = vst [vmem:[%s4 + $0x8] sm:$0xf] %v298
      %315 = vst [vmem:[%s4 + $0xc] sm:$0xf] %v299
      %316 = vst [vmem:[%s4 + $0x10] sm:$0xf] %v300
      %317 = vst [vmem:[%s4 + $0x14] sm:$0xf] %v301
      %318 = vst [vmem:[%s4 + $0x18] sm:$0xf] %v302
      %319 = vst [vmem:[%s4 + $0x1c] sm:$0xf] %v303
      %320 = vst [vmem:[%s4 + $0x20] sm:$0xf] %v304
      %321 = vst [vmem:[%s4 + $0x24] sm:$0xf] %v305
      %322 = vst [vmem:[%s4 + $0x28] sm:$0xf] %v306
      %323 = vst [vmem:[%s4 + $0x2c] sm:$0xf] %v307
      %324 = vst [vmem:[%s4 + $0x30] sm:$0xf] %v308
      %325 = vst [vmem:[%s4 + $0x34] sm:$0xf] %v309
      %326 = vst [vmem:[%s4 + $0x38] sm:$0xf] %v310
      %327 = vst [vmem:[%s4 + $0x3c] sm:$0xf] %v311
      %s328 = sld [smem:[#allocation3]]
      %v329 = vld [vmem:[%s3] sm:$0xff]
      %v330 = vld [vmem:[%s3 + $0x8] sm:$0xff]
      %v331 = vld [vmem:[%s3 + $0x10] sm:$0xff]
      %v332 = vld [vmem:[%s3 + $0x18] sm:$0xff]
      %v333 = vld [vmem:[%s3 + $0x20] sm:$0xff]
      %v334 = vld [vmem:[%s3 + $0x28] sm:$0xff]
      %v335 = vld [vmem:[%s3 + $0x30] sm:$0xff]
      %v336 = vld [vmem:[%s3 + $0x38] sm:$0xff]
      %v337 = vld [vmem:[%s3 + $0x40] sm:$0xff]
      %v338 = vld [vmem:[%s3 + $0x48] sm:$0xff]
      %v339 = vld [vmem:[%s3 + $0x50] sm:$0xff]
      %v340 = vld [vmem:[%s3 + $0x58] sm:$0xff]
      %v341 = vld [vmem:[%s3 + $0x60] sm:$0xff]
      %v342 = vld [vmem:[%s3 + $0x68] sm:$0xff]
      %v343 = vld [vmem:[%s3 + $0x70] sm:$0xff]
      %v344 = vld [vmem:[%s3 + $0x78] sm:$0xff]
      %v345 = vstv %s328
      %v346 = vmul.f32 %v345, %v329
      %v347 = vmul.f32 %v345, %v330
      %v348 = vmul.f32 %v345, %v331
      %v349 = vmul.f32 %v345, %v332
      %v350 = vmul.f32 %v345, %v333
      %v351 = vmul.f32 %v345, %v334
      %v352 = vmul.f32 %v345, %v335
      %v353 = vmul.f32 %v345, %v336
      %v354 = vmul.f32 %v345, %v337
      %v355 = vmul.f32 %v345, %v338
      %v356 = vmul.f32 %v345, %v339
      %v357 = vmul.f32 %v345, %v340
      %v358 = vmul.f32 %v345, %v341
      %v359 = vmul.f32 %v345, %v342
      %v360 = vmul.f32 %v345, %v343
      %v361 = vmul.f32 %v345, %v344
      %s362 = sld [smem:[#allocation3 + $0x1]]
      %v363 = vstv %s362
      %v364 = vmul.f32 %v363, %v280
      %v365 = vmul.f32 %v363, %v281
      %v366 = vmul.f32 %v363, %v282
      %v367 = vmul.f32 %v363, %v283
      %v368 = vmul.f32 %v363, %v284
      %v369 = vmul.f32 %v363, %v285
      %v370 = vmul.f32 %v363, %v286
      %v371 = vmul.f32 %v363, %v287
      %v372 = vmul.f32 %v363, %v288
      %v373 = vmul.f32 %v363, %v289
      %v374 = vmul.f32 %v363, %v290
      %v375 = vmul.f32 %v363, %v291
      %v376 = vmul.f32 %v363, %v292
      %v377 = vmul.f32 %v363, %v293
      %v378 = vmul.f32 %v363, %v294
      %v379 = vmul.f32 %v363, %v295
      %v380 = vadd.f32 %v346, %v364
      %v381 = vadd.f32 %v347, %v365
      %v382 = vadd.f32 %v348, %v366
      %v383 = vadd.f32 %v349, %v367
      %v384 = vadd.f32 %v350, %v368
      %v385 = vadd.f32 %v351, %v369
      %v386 = vadd.f32 %v352, %v370
      %v387 = vadd.f32 %v353, %v371
      %v388 = vadd.f32 %v354, %v372
      %v389 = vadd.f32 %v355, %v373
      %v390 = vadd.f32 %v356, %v374
      %v391 = vadd.f32 %v357, %v375
      %v392 = vadd.f32 %v358, %v376
      %v393 = vadd.f32 %v359, %v377
      %v394 = vadd.f32 %v360, %v378
      %v395 = vadd.f32 %v361, %v379
      %396 = vst [vmem:[%s5] sm:$0xff] %v380
      %397 = vst [vmem:[%s5 + $0x8] sm:$0xff] %v381
      %398 = vst [vmem:[%s5 + $0x10] sm:$0xff] %v382
      %399 = vst [vmem:[%s5 + $0x18] sm:$0xff] %v383
      %400 = vst [vmem:[%s5 + $0x20] sm:$0xff] %v384
      %401 = vst [vmem:[%s5 + $0x28] sm:$0xff] %v385
      %402 = vst [vmem:[%s5 + $0x30] sm:$0xff] %v386
      %403 = vst [vmem:[%s5 + $0x38] sm:$0xff] %v387
      %404 = vst [vmem:[%s5 + $0x40] sm:$0xff] %v388
      %405 = vst [vmem:[%s5 + $0x48] sm:$0xff] %v389
      %406 = vst [vmem:[%s5 + $0x50] sm:$0xff] %v390
      %407 = vst [vmem:[%s5 + $0x58] sm:$0xff] %v391
      %408 = vst [vmem:[%s5 + $0x60] sm:$0xff] %v392
      %409 = vst [vmem:[%s5 + $0x68] sm:$0xff] %v393
      %410 = vst [vmem:[%s5 + $0x70] sm:$0xff] %v394
      %411 = vst [vmem:[%s5 + $0x78] sm:$0xff] %v395
    $region29: #{gprgnn_forward.16} parent=1 // pred_fallthru
      _
    // Predicated region
    $region30: #{gprgnn_forward.16} parent=1 // pred_check
      _
    $region31: #{gprgnn_forward.16} parent=1 // pred_check_branch
      %413 = sbr.rel (0) target = $region33
    $region32: #{gprgnn_forward.16} parent=1 // pred_region
      _
    $region33: #{gprgnn_forward.16} parent=1 // pred_fallthru
      _
    // Predicated region
    $region34: #{gprgnn_forward.16} parent=1 // pred_check
      _
    $region35: #{gprgnn_forward.16} parent=1 // pred_check_branch
      %415 = sbr.rel (0) target = $region37
    $region36: #{gprgnn_forward.16} parent=1 // pred_region
      _
    $region37: #{gprgnn_forward.16} parent=1 // pred_fallthru
      _
    // Predicated region
    $region38: #{gprgnn_forward.16} parent=1 // pred_check
      _
    $region39: #{gprgnn_forward.16} parent=1 // pred_check_branch
      %417 = sbr.rel (0) target = $region41
    $region40: #{gprgnn_forward.16} parent=1 // pred_region
      _
    $region41: #{gprgnn_forward.16} parent=1 // pred_fallthru
      _
    // Predicated region
    $region42: #{gprgnn_forward.16} parent=1 // pred_check
      _
    $region43: #{gprgnn_forward.16} parent=1 // pred_check_branch
      %419 = sbr.rel (0) target = $region45
    $region44: #{gprgnn_forward.16} parent=1 // pred_region
      _
    $region45: #{gprgnn_forward.16} parent=1 // pred_fallthru
      _
    %420 = vsyncpa [#allocation4], 1

// kernel: gprgnn_forward.25
$region0: #{gprgnn_forward.25}
  #allocation0 [shape = 'u32[]', space=smem, size = 0x4, offset = 0x4, fixed_abs, tag = 'smem constant byte address 0x4 - core index']
  #allocation1 [shape = 'u32[72,128]{1,0:T(1,128)}', space=vmem, size = 0x9000, scoped, tag = 'internal scratch']
  #allocation2 [shape = 'f32[128,128]{1,0:T(8,128)}', space=vmem, size = 0x10000, scoped, tag = 'scratch operand']
  %s0 = inlined_call_operand.vmem [shape: f32[2], index: 0, kind: input, shape index: {}]
  %s1 = inlined_call_operand.vmem [shape: bf16[128,128], index: 1, kind: input, shape index: {}]
  %s2 = inlined_call_operand.vmem [shape: bf16[128,128], index: 2, kind: input, shape index: {}]
  %s3 = inlined_call_operand.vmem [shape: f32[128,128], index: 3, kind: input, shape index: {}]
  %s4 = inlined_call_operand.hbm [shape: bf16[128,128], index: 4, kind: output, shape index: {0}]
  %s5 = inlined_call_operand.vmem [shape: f32[128,128], index: 5, kind: output, shape index: {1}]
  %6 = xla_tuple %s4, %s5
  %s7 = sld [smem:[#allocation0]]
  $region46: #{gprgnn_forward.25} parent=0
    _
  %s9 = ssub.s32 1, %s7
  %s10 = scalar_select 0, %s9, %s7
  $region1: #{gprgnn_forward.25} parent=0
    #allocation3 [shape = 'u8[512]{0}', space=smem, size = 0x200, scoped, tag = 'input window, operand 0, single buffered']
    #allocation4 [shape = 's32[1]{0}', space=sflag, size = 0x4, scoped, tag = 'scoped memory for gprgnn_forward.25']
    #allocation5 [shape = 's32[1]{0}', space=sflag, size = 0x4, scoped, tag = 'scoped memory for gprgnn_forward.25']
    #allocation6 [shape = 'u8[32768]{0}', space=vmem, size = 0x8000, scoped, tag = 'output window, operand 0, single buffered']
    %11 = vsyncpa [#allocation5], 0
    %12 = vsyncpa [#allocation4], 0
    // Predicated region
    $region2: #{gprgnn_forward.25} parent=1 // pred_check
      _
    $region3: #{gprgnn_forward.25} parent=1 // pred_check_branch
      %14 = sbr.rel (0) target = $region5
    $region4: #{gprgnn_forward.25} parent=1 // pred_region
      %16 = vsyncadd [#allocation5], 0
      %s18 = sshll.u32 %s0, 4
      %s19 = int_to_ptr.vmem [resolvable:$true] %s18
      %21 = dma.vmem_to_smem %s19, 16, [#allocation3], [#allocation5]
    $region5: #{gprgnn_forward.25} parent=1 // pred_fallthru
      _
    // Predicated region
    $region6: #{gprgnn_forward.25} parent=1 // pred_check
      _
    $region7: #{gprgnn_forward.25} parent=1 // pred_check_branch
      %23 = sbr.rel (0) target = $region9
    $region8: #{gprgnn_forward.25} parent=1 // pred_region
      _
    $region9: #{gprgnn_forward.25} parent=1 // pred_fallthru
      _
    // Predicated region
    $region10: #{gprgnn_forward.25} parent=1 // pred_check
      _
    $region11: #{gprgnn_forward.25} parent=1 // pred_check_branch
      %25 = sbr.rel (0) target = $region13
    $region12: #{gprgnn_forward.25} parent=1 // pred_region
      _
    $region13: #{gprgnn_forward.25} parent=1 // pred_fallthru
      _
    // Predicated region
    $region14: #{gprgnn_forward.25} parent=1 // pred_check
      _
    $region15: #{gprgnn_forward.25} parent=1 // pred_check_branch
      %27 = sbr.rel (0) target = $region17
    $region16: #{gprgnn_forward.25} parent=1 // pred_region
      _
    $region17: #{gprgnn_forward.25} parent=1 // pred_fallthru
      _
    // Predicated region
    $region18: #{gprgnn_forward.25} parent=1 // pred_check
      _
    $region19: #{gprgnn_forward.25} parent=1 // pred_check_branch
      %29 = sbr.rel (0) target = $region21
    $region20: #{gprgnn_forward.25} parent=1 // pred_region
      %31 = dma.done [#allocation5], 16
    $region21: #{gprgnn_forward.25} parent=1 // pred_fallthru
      _
    %32 = sfence
    %p33 = scmp.eq.s32.totalorder 0, 0
    // Predicated region
    $region22: #{gprgnn_forward.25} parent=1 // pred_check
      %p34 = pneg %p33
    $region23: #{gprgnn_forward.25} parent=1 // pred_check_branch
      %36 = sbr.rel (%p34) target = $region25
    $region24: #{gprgnn_forward.25} parent=1 // pred_region
      %37 = vst [vmem:[#allocation2] sm:$0xff] 0.0
      %38 = vst [vmem:[#allocation2 + $0x8] sm:$0xff] 0.0
      %39 = vst [vmem:[#allocation2 + $0x10] sm:$0xff] 0.0
      %40 = vst [vmem:[#allocation2 + $0x18] sm:$0xff] 0.0
      %41 = vst [vmem:[#allocation2 + $0x20] sm:$0xff] 0.0
      %42 = vst [vmem:[#allocation2 + $0x28] sm:$0xff] 0.0
      %43 = vst [vmem:[#allocation2 + $0x30] sm:$0xff] 0.0
      %44 = vst [vmem:[#allocation2 + $0x38] sm:$0xff] 0.0
      %45 = vst [vmem:[#allocation2 + $0x40] sm:$0xff] 0.0
      %46 = vst [vmem:[#allocation2 + $0x48] sm:$0xff] 0.0
      %47 = vst [vmem:[#allocation2 + $0x50] sm:$0xff] 0.0
      %48 = vst [vmem:[#allocation2 + $0x58] sm:$0xff] 0.0
      %49 = vst [vmem:[#allocation2 + $0x60] sm:$0xff] 0.0
      %50 = vst [vmem:[#allocation2 + $0x68] sm:$0xff] 0.0
      %51 = vst [vmem:[#allocation2 + $0x70] sm:$0xff] 0.0
      %52 = vst [vmem:[#allocation2 + $0x78] sm:$0xff] 0.0
    $region25: #{gprgnn_forward.25} parent=1 // pred_fallthru
      _
    %v53 = vld [vmem:[#allocation2] sm:$0xff]
    %v54 = vld [vmem:[#allocation2 + $0x8] sm:$0xff]
    %v55 = vld [vmem:[#allocation2 + $0x10] sm:$0xff]
    %v56 = vld [vmem:[#allocation2 + $0x18] sm:$0xff]
    %v57 = vld [vmem:[#allocation2 + $0x20] sm:$0xff]
    %v58 = vld [vmem:[#allocation2 + $0x28] sm:$0xff]
    %v59 = vld [vmem:[#allocation2 + $0x30] sm:$0xff]
    %v60 = vld [vmem:[#allocation2 + $0x38] sm:$0xff]
    %v61 = vld [vmem:[#allocation2 + $0x40] sm:$0xff]
    %v62 = vld [vmem:[#allocation2 + $0x48] sm:$0xff]
    %v63 = vld [vmem:[#allocation2 + $0x50] sm:$0xff]
    %v64 = vld [vmem:[#allocation2 + $0x58] sm:$0xff]
    %v65 = vld [vmem:[#allocation2 + $0x60] sm:$0xff]
    %v66 = vld [vmem:[#allocation2 + $0x68] sm:$0xff]
    %v67 = vld [vmem:[#allocation2 + $0x70] sm:$0xff]
    %v68 = vld [vmem:[#allocation2 + $0x78] sm:$0xff]
    %v69 = vld [vmem:[%s1] sm:$0xf]
    %v70 = vld [vmem:[%s1 + $0x4] sm:$0xf]
    %v71 = vld [vmem:[%s1 + $0x8] sm:$0xf]
    %v72 = vld [vmem:[%s1 + $0xc] sm:$0xf]
    %v73 = vld [vmem:[%s1 + $0x10] sm:$0xf]
    %v74 = vld [vmem:[%s1 + $0x14] sm:$0xf]
    %v75 = vld [vmem:[%s1 + $0x18] sm:$0xf]
    %v76 = vld [vmem:[%s1 + $0x1c] sm:$0xf]
    %v77 = vld [vmem:[%s1 + $0x20] sm:$0xf]
    %v78 = vld [vmem:[%s1 + $0x24] sm:$0xf]
    %v79 = vld [vmem:[%s1 + $0x28] sm:$0xf]
    %v80 = vld [vmem:[%s1 + $0x2c] sm:$0xf]
    %v81 = vld [vmem:[%s1 + $0x30] sm:$0xf]
    %v82 = vld [vmem:[%s1 + $0x34] sm:$0xf]
    %v83 = vld [vmem:[%s1 + $0x38] sm:$0xf]
    %v84 = vld [vmem:[%s1 + $0x3c] sm:$0xf]
    %v85 = vld [vmem:[%s2] sm:$0xf]
    %v86 = vld [vmem:[%s2 + $0x4] sm:$0xf]
    %v87 = vld [vmem:[%s2 + $0x8] sm:$0xf]
    %v88 = vld [vmem:[%s2 + $0xc] sm:$0xf]
    %v89 = vld [vmem:[%s2 + $0x10] sm:$0xf]
    %v90 = vld [vmem:[%s2 + $0x14] sm:$0xf]
    %v91 = vld [vmem:[%s2 + $0x18] sm:$0xf]
    %v92 = vld [vmem:[%s2 + $0x1c] sm:$0xf]
    %v93 = vld [vmem:[%s2 + $0x20] sm:$0xf]
    %v94 = vld [vmem:[%s2 + $0x24] sm:$0xf]
    %v95 = vld [vmem:[%s2 + $0x28] sm:$0xf]
    %v96 = vld [vmem:[%s2 + $0x2c] sm:$0xf]
    %v97 = vld [vmem:[%s2 + $0x30] sm:$0xf]
    %v98 = vld [vmem:[%s2 + $0x34] sm:$0xf]
    %v99 = vld [vmem:[%s2 + $0x38] sm:$0xf]
    %v100 = vld [vmem:[%s2 + $0x3c] sm:$0xf]
    %v117 = vunpack.c.l.b16 %v69
    %v118 = vunpack.c.l.b16 %v70
    %v119 = vunpack.c.l.b16 %v71
    %v120 = vunpack.c.l.b16 %v72
    %v121 = vunpack.c.l.b16 %v73
    %v122 = vunpack.c.l.b16 %v74
    %v123 = vunpack.c.l.b16 %v75
    %v124 = vunpack.c.l.b16 %v76
    %v125 = vunpack.c.l.b16 %v77
    %v126 = vunpack.c.l.b16 %v78
    %v127 = vunpack.c.l.b16 %v79
    %v128 = vunpack.c.l.b16 %v80
    %v129 = vunpack.c.l.b16 %v81
    %v130 = vunpack.c.l.b16 %v82
    %v131 = vunpack.c.l.b16 %v83
    %v132 = vunpack.c.l.b16 %v84
    %v133 = vpack.c.b16 %v118, %v117
    %v134 = vpack.c.b16 %v120, %v119
    %v135 = vpack.c.b16 %v122, %v121
    %v136 = vpack.c.b16 %v124, %v123
    %v137 = vpack.c.b16 %v126, %v125
    %v138 = vpack.c.b16 %v128, %v127
    %v139 = vpack.c.b16 %v130, %v129
    %v140 = vpack.c.b16 %v132, %v131
    %v165 = vunpack.c.l.b16 %v85
    %v166 = vunpack.c.l.b16 %v86
    %v167 = vunpack.c.l.b16 %v87
    %v168 = vunpack.c.l.b16 %v88
    %v169 = vunpack.c.l.b16 %v89
    %v170 = vunpack.c.l.b16 %v90
    %v171 = vunpack.c.l.b16 %v91
    %v172 = vunpack.c.l.b16 %v92
    %v173 = vunpack.c.l.b16 %v93
    %v174 = vunpack.c.l.b16 %v94
    %v175 = vunpack.c.l.b16 %v95
    %v176 = vunpack.c.l.b16 %v96
    %v177 = vunpack.c.l.b16 %v97
    %v178 = vunpack.c.l.b16 %v98
    %v179 = vunpack.c.l.b16 %v99
    %v180 = vunpack.c.l.b16 %v100
    %v181 = vpack.c.b16 %v166, %v165
    %v182 = vpack.c.b16 %v168, %v167
    %v183 = vpack.c.b16 %v170, %v169
    %v184 = vpack.c.b16 %v172, %v171
    %v185 = vpack.c.b16 %v174, %v173
    %v186 = vpack.c.b16 %v176, %v175
    %v187 = vpack.c.b16 %v178, %v177
    %v188 = vpack.c.b16 %v180, %v179
    %197 = vmatpush.bf16.msra.mxu0 %v188
    %198 = vmatpush.bf16.msra.mxu0 %v187
    %199 = vmatpush.bf16.msra.mxu0 %v186
    %200 = vmatpush.bf16.msra.mxu0 %v185
    %201 = vmatpush.bf16.msra.mxu0 %v184
    %202 = vmatpush.bf16.msra.mxu0 %v183
    %203 = vmatpush.bf16.msra.mxu0 %v182
    %204 = vmatpush.bf16.msra.mxu0 %v181
    %205 = vmatmul.bf16.gmra.mxu0 %v133
    %v206 = vpop.f32.mrf.mxu0
    %v207 = vadd.f32 0.0, %v206
    %v208 = vpop.f32.mrf.mxu0
    %v209 = vadd.f32 0.0, %v208
    %210 = vmatmul.bf16.gmra.mxu0 %v134
    %v211 = vpop.f32.mrf.mxu0
    %v212 = vadd.f32 0.0, %v211
    %v213 = vpop.f32.mrf.mxu0
    %v214 = vadd.f32 0.0, %v213
    %215 = vmatmul.bf16.gmra.mxu0 %v135
    %v216 = vpop.f32.mrf.mxu0
    %v217 = vadd.f32 0.0, %v216
    %v218 = vpop.f32.mrf.mxu0
    %v219 = vadd.f32 0.0, %v218
    %220 = vmatmul.bf16.gmra.mxu0 %v136
    %v221 = vpop.f32.mrf.mxu0
    %v222 = vadd.f32 0.0, %v221
    %v223 = vpop.f32.mrf.mxu0
    %v224 = vadd.f32 0.0, %v223
    %225 = vmatmul.bf16.gmra.mxu0 %v137
    %v226 = vpop.f32.mrf.mxu0
    %v227 = vadd.f32 0.0, %v226
    %v228 = vpop.f32.mrf.mxu0
    %v229 = vadd.f32 0.0, %v228
    %230 = vmatmul.bf16.gmra.mxu0 %v138
    %v231 = vpop.f32.mrf.mxu0
    %v232 = vadd.f32 0.0, %v231
    %v233 = vpop.f32.mrf.mxu0
    %v234 = vadd.f32 0.0, %v233
    %235 = vmatmul.bf16.gmra.mxu0 %v139
    %v236 = vpop.f32.mrf.mxu0
    %v237 = vadd.f32 0.0, %v236
    %v238 = vpop.f32.mrf.mxu0
    %v239 = vadd.f32 0.0, %v238
    %240 = vmatmul.bf16.gmra.mxu0 %v140
    %v241 = vpop.f32.mrf.mxu0
    %v242 = vadd.f32 0.0, %v241
    %v243 = vpop.f32.mrf.mxu0
    %v244 = vadd.f32 0.0, %v243
    %245 = vdwg.mxu0
    %v246 = vadd.f32 %v53, %v207
    %v247 = vadd.f32 %v54, %v209
    %v248 = vadd.f32 %v55, %v212
    %v249 = vadd.f32 %v56, %v214
    %v250 = vadd.f32 %v57, %v217
    %v251 = vadd.f32 %v58, %v219
    %v252 = vadd.f32 %v59, %v222
    %v253 = vadd.f32 %v60, %v224
    %v254 = vadd.f32 %v61, %v227
    %v255 = vadd.f32 %v62, %v229
    %v256 = vadd.f32 %v63, %v232
    %v257 = vadd.f32 %v64, %v234
    %v258 = vadd.f32 %v65, %v237
    %v259 = vadd.f32 %v66, %v239
    %v260 = vadd.f32 %v67, %v242
    %v261 = vadd.f32 %v68, %v244
    %262 = vst [vmem:[#allocation2] sm:$0xff] %v246
    %263 = vst [vmem:[#allocation2 + $0x8] sm:$0xff] %v247
    %264 = vst [vmem:[#allocation2 + $0x10] sm:$0xff] %v248
    %265 = vst [vmem:[#allocation2 + $0x18] sm:$0xff] %v249
    %266 = vst [vmem:[#allocation2 + $0x20] sm:$0xff] %v250
    %267 = vst [vmem:[#allocation2 + $0x28] sm:$0xff] %v251
    %268 = vst [vmem:[#allocation2 + $0x30] sm:$0xff] %v252
    %269 = vst [vmem:[#allocation2 + $0x38] sm:$0xff] %v253
    %270 = vst [vmem:[#allocation2 + $0x40] sm:$0xff] %v254
    %271 = vst [vmem:[#allocation2 + $0x48] sm:$0xff] %v255
    %272 = vst [vmem:[#allocation2 + $0x50] sm:$0xff] %v256
    %273 = vst [vmem:[#allocation2 + $0x58] sm:$0xff] %v257
    %274 = vst [vmem:[#allocation2 + $0x60] sm:$0xff] %v258
    %275 = vst [vmem:[#allocation2 + $0x68] sm:$0xff] %v259
    %276 = vst [vmem:[#allocation2 + $0x70] sm:$0xff] %v260
    %277 = vst [vmem:[#allocation2 + $0x78] sm:$0xff] %v261
    // Predicated region
    $region26: #{gprgnn_forward.25} parent=1 // pred_check
      %p278 = pneg %p33
    $region27: #{gprgnn_forward.25} parent=1 // pred_check_branch
      %280 = sbr.rel (%p278) target = $region29
    $region28: #{gprgnn_forward.25} parent=1 // pred_region
      %v281 = vld [vmem:[#allocation2] sm:$0xff]
      %v282 = vld [vmem:[#allocation2 + $0x8] sm:$0xff]
      %v283 = vld [vmem:[#allocation2 + $0x10] sm:$0xff]
      %v284 = vld [vmem:[#allocation2 + $0x18] sm:$0xff]
      %v285 = vld [vmem:[#allocation2 + $0x20] sm:$0xff]
      %v286 = vld [vmem:[#allocation2 + $0x28] sm:$0xff]
      %v287 = vld [vmem:[#allocation2 + $0x30] sm:$0xff]
      %v288 = vld [vmem:[#allocation2 + $0x38] sm:$0xff]
      %v289 = vld [vmem:[#allocation2 + $0x40] sm:$0xff]
      %v290 = vld [vmem:[#allocation2 + $0x48] sm:$0xff]
      %v291 = vld [vmem:[#allocation2 + $0x50] sm:$0xff]
      %v292 = vld [vmem:[#allocation2 + $0x58] sm:$0xff]
      %v293 = vld [vmem:[#allocation2 + $0x60] sm:$0xff]
      %v294 = vld [vmem:[#allocation2 + $0x68] sm:$0xff]
      %v295 = vld [vmem:[#allocation2 + $0x70] sm:$0xff]
      %v296 = vld [vmem:[#allocation2 + $0x78] sm:$0xff]
      %v297 = vpack.c.bf16 %v281, %v281
      %v298 = vpack.c.bf16 %v282, %v282
      %v299 = vpack.c.bf16 %v283, %v283
      %v300 = vpack.c.bf16 %v284, %v284
      %v301 = vpack.c.bf16 %v285, %v285
      %v302 = vpack.c.bf16 %v286, %v286
      %v303 = vpack.c.bf16 %v287, %v287
      %v304 = vpack.c.bf16 %v288, %v288
      %v305 = vpack.c.bf16 %v289, %v289
      %v306 = vpack.c.bf16 %v290, %v290
      %v307 = vpack.c.bf16 %v291, %v291
      %v308 = vpack.c.bf16 %v292, %v292
      %v309 = vpack.c.bf16 %v293, %v293
      %v310 = vpack.c.bf16 %v294, %v294
      %v311 = vpack.c.bf16 %v295, %v295
      %v312 = vpack.c.bf16 %v296, %v296
      %313 = vst [vmem:[#allocation6] sm:$0xf] %v297
      %314 = vst [vmem:[#allocation6 + $0x4] sm:$0xf] %v298
      %315 = vst [vmem:[#allocation6 + $0x8] sm:$0xf] %v299
      %316 = vst [vmem:[#allocation6 + $0xc] sm:$0xf] %v300
      %317 = vst [vmem:[#allocation6 + $0x10] sm:$0xf] %v301
      %318 = vst [vmem:[#allocation6 + $0x14] sm:$0xf] %v302
      %319 = vst [vmem:[#allocation6 + $0x18] sm:$0xf] %v303
      %320 = vst [vmem:[#allocation6 + $0x1c] sm:$0xf] %v304
      %321 = vst [vmem:[#allocation6 + $0x20] sm:$0xf] %v305
      %322 = vst [vmem:[#allocation6 + $0x24] sm:$0xf] %v306
      %323 = vst [vmem:[#allocation6 + $0x28] sm:$0xf] %v307
      %324 = vst [vmem:[#allocation6 + $0x2c] sm:$0xf] %v308
      %325 = vst [vmem:[#allocation6 + $0x30] sm:$0xf] %v309
      %326 = vst [vmem:[#allocation6 + $0x34] sm:$0xf] %v310
      %327 = vst [vmem:[#allocation6 + $0x38] sm:$0xf] %v311
      %328 = vst [vmem:[#allocation6 + $0x3c] sm:$0xf] %v312
      %s329 = sld [smem:[#allocation3]]
      %v330 = vld [vmem:[%s3] sm:$0xff]
      %v331 = vld [vmem:[%s3 + $0x8] sm:$0xff]
      %v332 = vld [vmem:[%s3 + $0x10] sm:$0xff]
      %v333 = vld [vmem:[%s3 + $0x18] sm:$0xff]
      %v334 = vld [vmem:[%s3 + $0x20] sm:$0xff]
      %v335 = vld [vmem:[%s3 + $0x28] sm:$0xff]
      %v336 = vld [vmem:[%s3 + $0x30] sm:$0xff]
      %v337 = vld [vmem:[%s3 + $0x38] sm:$0xff]
      %v338 = vld [vmem:[%s3 + $0x40] sm:$0xff]
      %v339 = vld [vmem:[%s3 + $0x48] sm:$0xff]
      %v340 = vld [vmem:[%s3 + $0x50] sm:$0xff]
      %v341 = vld [vmem:[%s3 + $0x58] sm:$0xff]
      %v342 = vld [vmem:[%s3 + $0x60] sm:$0xff]
      %v343 = vld [vmem:[%s3 + $0x68] sm:$0xff]
      %v344 = vld [vmem:[%s3 + $0x70] sm:$0xff]
      %v345 = vld [vmem:[%s3 + $0x78] sm:$0xff]
      %v346 = vstv %s329
      %v347 = vmul.f32 %v346, %v330
      %v348 = vmul.f32 %v346, %v331
      %v349 = vmul.f32 %v346, %v332
      %v350 = vmul.f32 %v346, %v333
      %v351 = vmul.f32 %v346, %v334
      %v352 = vmul.f32 %v346, %v335
      %v353 = vmul.f32 %v346, %v336
      %v354 = vmul.f32 %v346, %v337
      %v355 = vmul.f32 %v346, %v338
      %v356 = vmul.f32 %v346, %v339
      %v357 = vmul.f32 %v346, %v340
      %v358 = vmul.f32 %v346, %v341
      %v359 = vmul.f32 %v346, %v342
      %v360 = vmul.f32 %v346, %v343
      %v361 = vmul.f32 %v346, %v344
      %v362 = vmul.f32 %v346, %v345
      %s363 = sld [smem:[#allocation3 + $0x1]]
      %v364 = vstv %s363
      %v365 = vmul.f32 %v364, %v281
      %v366 = vmul.f32 %v364, %v282
      %v367 = vmul.f32 %v364, %v283
      %v368 = vmul.f32 %v364, %v284
      %v369 = vmul.f32 %v364, %v285
      %v370 = vmul.f32 %v364, %v286
      %v371 = vmul.f32 %v364, %v287
      %v372 = vmul.f32 %v364, %v288
      %v373 = vmul.f32 %v364, %v289
      %v374 = vmul.f32 %v364, %v290
      %v375 = vmul.f32 %v364, %v291
      %v376 = vmul.f32 %v364, %v292
      %v377 = vmul.f32 %v364, %v293
      %v378 = vmul.f32 %v364, %v294
      %v379 = vmul.f32 %v364, %v295
      %v380 = vmul.f32 %v364, %v296
      %v381 = vadd.f32 %v347, %v365
      %v382 = vadd.f32 %v348, %v366
      %v383 = vadd.f32 %v349, %v367
      %v384 = vadd.f32 %v350, %v368
      %v385 = vadd.f32 %v351, %v369
      %v386 = vadd.f32 %v352, %v370
      %v387 = vadd.f32 %v353, %v371
      %v388 = vadd.f32 %v354, %v372
      %v389 = vadd.f32 %v355, %v373
      %v390 = vadd.f32 %v356, %v374
      %v391 = vadd.f32 %v357, %v375
      %v392 = vadd.f32 %v358, %v376
      %v393 = vadd.f32 %v359, %v377
      %v394 = vadd.f32 %v360, %v378
      %v395 = vadd.f32 %v361, %v379
      %v396 = vadd.f32 %v362, %v380
      %397 = vst [vmem:[%s5] sm:$0xff] %v381
      %398 = vst [vmem:[%s5 + $0x8] sm:$0xff] %v382
      %399 = vst [vmem:[%s5 + $0x10] sm:$0xff] %v383
      %400 = vst [vmem:[%s5 + $0x18] sm:$0xff] %v384
      %401 = vst [vmem:[%s5 + $0x20] sm:$0xff] %v385
      %402 = vst [vmem:[%s5 + $0x28] sm:$0xff] %v386
      %403 = vst [vmem:[%s5 + $0x30] sm:$0xff] %v387
      %404 = vst [vmem:[%s5 + $0x38] sm:$0xff] %v388
      %405 = vst [vmem:[%s5 + $0x40] sm:$0xff] %v389
      %406 = vst [vmem:[%s5 + $0x48] sm:$0xff] %v390
      %407 = vst [vmem:[%s5 + $0x50] sm:$0xff] %v391
      %408 = vst [vmem:[%s5 + $0x58] sm:$0xff] %v392
      %409 = vst [vmem:[%s5 + $0x60] sm:$0xff] %v393
      %410 = vst [vmem:[%s5 + $0x68] sm:$0xff] %v394
      %411 = vst [vmem:[%s5 + $0x70] sm:$0xff] %v395
      %412 = vst [vmem:[%s5 + $0x78] sm:$0xff] %v396
    $region29: #{gprgnn_forward.25} parent=1 // pred_fallthru
      _
    // Predicated region
    $region30: #{gprgnn_forward.25} parent=1 // pred_check
      _
    $region31: #{gprgnn_forward.25} parent=1 // pred_check_branch
      %414 = sbr.rel (0) target = $region33
    $region32: #{gprgnn_forward.25} parent=1 // pred_region
      %416 = vsyncadd [#allocation4], 0
      %s417 = sshll.u32 [#allocation6], 4
      %s418 = int_to_ptr.vmem [resolvable:$true] %s417
      %s419 = sshll.u32 %s4, 4
      %s420 = int_to_ptr.hbm [resolvable:$true] %s419
      %425 = dma.vmem_to_hbm [thread:$0]  %s418, 1024, %s420, [#allocation4], 64, 64, 4
    $region33: #{gprgnn_forward.25} parent=1 // pred_fallthru
      _
    // Predicated region
    $region34: #{gprgnn_forward.25} parent=1 // pred_check
      _
    $region35: #{gprgnn_forward.25} parent=1 // pred_check_branch
      %427 = sbr.rel (0) target = $region37
    $region36: #{gprgnn_forward.25} parent=1 // pred_region
      _
    $region37: #{gprgnn_forward.25} parent=1 // pred_fallthru
      _
    // Predicated region
    $region38: #{gprgnn_forward.25} parent=1 // pred_check
      _
    $region39: #{gprgnn_forward.25} parent=1 // pred_check_branch
      %429 = sbr.rel (0) target = $region41
    $region40: #{gprgnn_forward.25} parent=1 // pred_region
      %431 = dma.done [#allocation4], 1024
    $region41: #{gprgnn_forward.25} parent=1 // pred_fallthru
      _
    // Predicated region
    $region42: #{gprgnn_forward.25} parent=1 // pred_check
      _
    $region43: #{gprgnn_forward.25} parent=1 // pred_check_branch
      %433 = sbr.rel (0) target = $region45
    $region44: #{gprgnn_forward.25} parent=1 // pred_region
      _
    $region45: #{gprgnn_forward.25} parent=1 // pred_fallthru
      _
    %434 = vsyncpa [#allocation4], 1
    %435 = vsyncpa [#allocation5], 1

// kernel: gprgnn_forward.13
$region0: #{gprgnn_forward.13}
  #allocation0 [shape = 'u32[]', space=smem, size = 0x4, offset = 0x4, fixed_abs, tag = 'smem constant byte address 0x4 - core index']
  #allocation1 [shape = 'u32[72,128]{1,0:T(1,128)}', space=vmem, size = 0x9000, scoped, tag = 'internal scratch']
  #allocation2 [shape = 'f32[128,128]{1,0:T(8,128)}', space=vmem, size = 0x10000, scoped, tag = 'scratch operand']
  %s0 = inlined_call_operand.vmem [shape: f32[128,128], index: 0, kind: input, shape index: {}]
  %s1 = inlined_call_operand.vmem [shape: f32[128,128], index: 1, kind: input, shape index: {}]
  %s2 = inlined_call_operand.vmem [shape: f32[1,128], index: 2, kind: input, shape index: {}]
  %s3 = inlined_call_operand.vmem [shape: f32[1,128], index: 3, kind: input, shape index: {}]
  %s4 = inlined_call_operand.vmem [shape: f32[1,128], index: 4, kind: input, shape index: {}]
  %s5 = inlined_call_operand.vmem [shape: f32[128,128], index: 5, kind: output, shape index: {}]
  %s6 = sld [smem:[#allocation0]]
  $region38: #{gprgnn_forward.13} parent=0
    _
  %s8 = ssub.s32 1, %s6
  %s9 = scalar_select 0, %s8, %s6
  // Predicated region
  $region2: #{gprgnn_forward.13} parent=0 // pred_check
    _
  $region3: #{gprgnn_forward.13} parent=0 // pred_check_branch
    %11 = sbr.rel (0) target = $region5
  $region4: #{gprgnn_forward.13} parent=0 // pred_region
    _
  $region5: #{gprgnn_forward.13} parent=0 // pred_fallthru
    _
  // Predicated region
  $region6: #{gprgnn_forward.13} parent=0 // pred_check
    _
  $region7: #{gprgnn_forward.13} parent=0 // pred_check_branch
    %13 = sbr.rel (0) target = $region9
  $region8: #{gprgnn_forward.13} parent=0 // pred_region
    _
  $region9: #{gprgnn_forward.13} parent=0 // pred_fallthru
    _
  // Predicated region
  $region10: #{gprgnn_forward.13} parent=0 // pred_check
    _
  $region11: #{gprgnn_forward.13} parent=0 // pred_check_branch
    %15 = sbr.rel (0) target = $region13
  $region12: #{gprgnn_forward.13} parent=0 // pred_region
    _
  $region13: #{gprgnn_forward.13} parent=0 // pred_fallthru
    _
  // Predicated region
  $region14: #{gprgnn_forward.13} parent=0 // pred_check
    _
  $region15: #{gprgnn_forward.13} parent=0 // pred_check_branch
    %17 = sbr.rel (0) target = $region17
  $region16: #{gprgnn_forward.13} parent=0 // pred_region
    _
  $region17: #{gprgnn_forward.13} parent=0 // pred_fallthru
    _
  // Predicated region
  $region18: #{gprgnn_forward.13} parent=0 // pred_check
    _
  $region19: #{gprgnn_forward.13} parent=0 // pred_check_branch
    %19 = sbr.rel (0) target = $region21
  $region20: #{gprgnn_forward.13} parent=0 // pred_region
    _
  $region21: #{gprgnn_forward.13} parent=0 // pred_fallthru
    _
  %p20 = scmp.eq.s32.totalorder 0, 0
  // Predicated region
  $region22: #{gprgnn_forward.13} parent=0 // pred_check
    %p21 = pneg %p20
  $region23: #{gprgnn_forward.13} parent=0 // pred_check_branch
    %23 = sbr.rel (%p21) target = $region25
  $region24: #{gprgnn_forward.13} parent=0 // pred_region
    %24 = vst [vmem:[#allocation2] sm:$0xff] 0.0
    %25 = vst [vmem:[#allocation2 + $0x8] sm:$0xff] 0.0
    %26 = vst [vmem:[#allocation2 + $0x10] sm:$0xff] 0.0
    %27 = vst [vmem:[#allocation2 + $0x18] sm:$0xff] 0.0
    %28 = vst [vmem:[#allocation2 + $0x20] sm:$0xff] 0.0
    %29 = vst [vmem:[#allocation2 + $0x28] sm:$0xff] 0.0
    %30 = vst [vmem:[#allocation2 + $0x30] sm:$0xff] 0.0
    %31 = vst [vmem:[#allocation2 + $0x38] sm:$0xff] 0.0
    %32 = vst [vmem:[#allocation2 + $0x40] sm:$0xff] 0.0
    %33 = vst [vmem:[#allocation2 + $0x48] sm:$0xff] 0.0
    %34 = vst [vmem:[#allocation2 + $0x50] sm:$0xff] 0.0
    %35 = vst [vmem:[#allocation2 + $0x58] sm:$0xff] 0.0
    %36 = vst [vmem:[#allocation2 + $0x60] sm:$0xff] 0.0
    %37 = vst [vmem:[#allocation2 + $0x68] sm:$0xff] 0.0
    %38 = vst [vmem:[#allocation2 + $0x70] sm:$0xff] 0.0
    %39 = vst [vmem:[#allocation2 + $0x78] sm:$0xff] 0.0
  $region25: #{gprgnn_forward.13} parent=0 // pred_fallthru
    _
  %v40 = vld [vmem:[#allocation2] sm:$0xff]
  %v41 = vld [vmem:[#allocation2 + $0x8] sm:$0xff]
  %v42 = vld [vmem:[#allocation2 + $0x10] sm:$0xff]
  %v43 = vld [vmem:[#allocation2 + $0x18] sm:$0xff]
  %v44 = vld [vmem:[#allocation2 + $0x20] sm:$0xff]
  %v45 = vld [vmem:[#allocation2 + $0x28] sm:$0xff]
  %v46 = vld [vmem:[#allocation2 + $0x30] sm:$0xff]
  %v47 = vld [vmem:[#allocation2 + $0x38] sm:$0xff]
  %v48 = vld [vmem:[#allocation2 + $0x40] sm:$0xff]
  %v49 = vld [vmem:[#allocation2 + $0x48] sm:$0xff]
  %v50 = vld [vmem:[#allocation2 + $0x50] sm:$0xff]
  %v51 = vld [vmem:[#allocation2 + $0x58] sm:$0xff]
  %v52 = vld [vmem:[#allocation2 + $0x60] sm:$0xff]
  %v53 = vld [vmem:[#allocation2 + $0x68] sm:$0xff]
  %v54 = vld [vmem:[#allocation2 + $0x70] sm:$0xff]
  %v55 = vld [vmem:[#allocation2 + $0x78] sm:$0xff]
  %v56 = vld [vmem:[%s0] sm:$0xff]
  %v57 = vld [vmem:[%s0 + $0x8] sm:$0xff]
  %v58 = vld [vmem:[%s0 + $0x10] sm:$0xff]
  %v59 = vld [vmem:[%s0 + $0x18] sm:$0xff]
  %v60 = vld [vmem:[%s0 + $0x20] sm:$0xff]
  %v61 = vld [vmem:[%s0 + $0x28] sm:$0xff]
  %v62 = vld [vmem:[%s0 + $0x30] sm:$0xff]
  %v63 = vld [vmem:[%s0 + $0x38] sm:$0xff]
  %v64 = vld [vmem:[%s0 + $0x40] sm:$0xff]
  %v65 = vld [vmem:[%s0 + $0x48] sm:$0xff]
  %v66 = vld [vmem:[%s0 + $0x50] sm:$0xff]
  %v67 = vld [vmem:[%s0 + $0x58] sm:$0xff]
  %v68 = vld [vmem:[%s0 + $0x60] sm:$0xff]
  %v69 = vld [vmem:[%s0 + $0x68] sm:$0xff]
  %v70 = vld [vmem:[%s0 + $0x70] sm:$0xff]
  %v71 = vld [vmem:[%s0 + $0x78] sm:$0xff]
  %v72 = vld [vmem:[%s1] sm:$0xff]
  %v73 = vld [vmem:[%s1 + $0x8] sm:$0xff]
  %v74 = vld [vmem:[%s1 + $0x10] sm:$0xff]
  %v75 = vld [vmem:[%s1 + $0x18] sm:$0xff]
  %v76 = vld [vmem:[%s1 + $0x20] sm:$0xff]
  %v77 = vld [vmem:[%s1 + $0x28] sm:$0xff]
  %v78 = vld [vmem:[%s1 + $0x30] sm:$0xff]
  %v79 = vld [vmem:[%s1 + $0x38] sm:$0xff]
  %v80 = vld [vmem:[%s1 + $0x40] sm:$0xff]
  %v81 = vld [vmem:[%s1 + $0x48] sm:$0xff]
  %v82 = vld [vmem:[%s1 + $0x50] sm:$0xff]
  %v83 = vld [vmem:[%s1 + $0x58] sm:$0xff]
  %v84 = vld [vmem:[%s1 + $0x60] sm:$0xff]
  %v85 = vld [vmem:[%s1 + $0x68] sm:$0xff]
  %v86 = vld [vmem:[%s1 + $0x70] sm:$0xff]
  %v87 = vld [vmem:[%s1 + $0x78] sm:$0xff]
  %88 = vmatpush.msra.mxu0 %v87
  %89 = vmatpush.msra.mxu0 %v86
  %90 = vmatpush.msra.mxu0 %v85
  %91 = vmatpush.msra.mxu0 %v84
  %92 = vmatpush.msra.mxu0 %v83
  %93 = vmatpush.msra.mxu0 %v82
  %94 = vmatpush.msra.mxu0 %v81
  %95 = vmatpush.msra.mxu0 %v80
  %96 = vmatpush.msra.mxu0 %v79
  %97 = vmatpush.msra.mxu0 %v78
  %98 = vmatpush.msra.mxu0 %v77
  %99 = vmatpush.msra.mxu0 %v76
  %100 = vmatpush.msra.mxu0 %v75
  %101 = vmatpush.msra.mxu0 %v74
  %102 = vmatpush.msra.mxu0 %v73
  %103 = vmatpush.msra.mxu0 %v72
  %104 = vmatmul.f32.gmra.mxu0 %v56
  %v105 = vpop.f32.mrf.mxu0
  %v106 = vadd.f32 0.0, %v105
  %107 = vmatmul.f32.gmra.mxu0 %v57
  %v108 = vpop.f32.mrf.mxu0
  %v109 = vadd.f32 0.0, %v108
  %110 = vmatmul.f32.gmra.mxu0 %v58
  %v111 = vpop.f32.mrf.mxu0
  %v112 = vadd.f32 0.0, %v111
  %113 = vmatmul.f32.gmra.mxu0 %v59
  %v114 = vpop.f32.mrf.mxu0
  %v115 = vadd.f32 0.0, %v114
  %116 = vmatmul.f32.gmra.mxu0 %v60
  %v117 = vpop.f32.mrf.mxu0
  %v118 = vadd.f32 0.0, %v117
  %119 = vmatmul.f32.gmra.mxu0 %v61
  %v120 = vpop.f32.mrf.mxu0
  %v121 = vadd.f32 0.0, %v120
  %122 = vmatmul.f32.gmra.mxu0 %v62
  %v123 = vpop.f32.mrf.mxu0
  %v124 = vadd.f32 0.0, %v123
  %125 = vmatmul.f32.gmra.mxu0 %v63
  %v126 = vpop.f32.mrf.mxu0
  %v127 = vadd.f32 0.0, %v126
  %128 = vmatmul.f32.gmra.mxu0 %v64
  %v129 = vpop.f32.mrf.mxu0
  %v130 = vadd.f32 0.0, %v129
  %131 = vmatmul.f32.gmra.mxu0 %v65
  %v132 = vpop.f32.mrf.mxu0
  %v133 = vadd.f32 0.0, %v132
  %134 = vmatmul.f32.gmra.mxu0 %v66
  %v135 = vpop.f32.mrf.mxu0
  %v136 = vadd.f32 0.0, %v135
  %137 = vmatmul.f32.gmra.mxu0 %v67
  %v138 = vpop.f32.mrf.mxu0
  %v139 = vadd.f32 0.0, %v138
  %140 = vmatmul.f32.gmra.mxu0 %v68
  %v141 = vpop.f32.mrf.mxu0
  %v142 = vadd.f32 0.0, %v141
  %143 = vmatmul.f32.gmra.mxu0 %v69
  %v144 = vpop.f32.mrf.mxu0
  %v145 = vadd.f32 0.0, %v144
  %146 = vmatmul.f32.gmra.mxu0 %v70
  %v147 = vpop.f32.mrf.mxu0
  %v148 = vadd.f32 0.0, %v147
  %149 = vmatmul.f32.gmra.mxu0 %v71
  %v150 = vpop.f32.mrf.mxu0
  %v151 = vadd.f32 0.0, %v150
  %152 = vdwg.mxu0
  %v153 = vadd.f32 %v40, %v106
  %v154 = vadd.f32 %v41, %v109
  %v155 = vadd.f32 %v42, %v112
  %v156 = vadd.f32 %v43, %v115
  %v157 = vadd.f32 %v44, %v118
  %v158 = vadd.f32 %v45, %v121
  %v159 = vadd.f32 %v46, %v124
  %v160 = vadd.f32 %v47, %v127
  %v161 = vadd.f32 %v48, %v130
  %v162 = vadd.f32 %v49, %v133
  %v163 = vadd.f32 %v50, %v136
  %v164 = vadd.f32 %v51, %v139
  %v165 = vadd.f32 %v52, %v142
  %v166 = vadd.f32 %v53, %v145
  %v167 = vadd.f32 %v54, %v148
  %v168 = vadd.f32 %v55, %v151
  %169 = vst [vmem:[#allocation2] sm:$0xff] %v153
  %170 = vst [vmem:[#allocation2 + $0x8] sm:$0xff] %v154
  %171 = vst [vmem:[#allocation2 + $0x10] sm:$0xff] %v155
  %172 = vst [vmem:[#allocation2 + $0x18] sm:$0xff] %v156
  %173 = vst [vmem:[#allocation2 + $0x20] sm:$0xff] %v157
  %174 = vst [vmem:[#allocation2 + $0x28] sm:$0xff] %v158
  %175 = vst [vmem:[#allocation2 + $0x30] sm:$0xff] %v159
  %176 = vst [vmem:[#allocation2 + $0x38] sm:$0xff] %v160
  %177 = vst [vmem:[#allocation2 + $0x40] sm:$0xff] %v161
  %178 = vst [vmem:[#allocation2 + $0x48] sm:$0xff] %v162
  %179 = vst [vmem:[#allocation2 + $0x50] sm:$0xff] %v163
  %180 = vst [vmem:[#allocation2 + $0x58] sm:$0xff] %v164
  %181 = vst [vmem:[#allocation2 + $0x60] sm:$0xff] %v165
  %182 = vst [vmem:[#allocation2 + $0x68] sm:$0xff] %v166
  %183 = vst [vmem:[#allocation2 + $0x70] sm:$0xff] %v167
  %184 = vst [vmem:[#allocation2 + $0x78] sm:$0xff] %v168
  // Predicated region
  $region26: #{gprgnn_forward.13} parent=0 // pred_check
    %p185 = pneg %p20
  $region27: #{gprgnn_forward.13} parent=0 // pred_check_branch
    %187 = sbr.rel (%p185) target = $region29
  $region28: #{gprgnn_forward.13} parent=0 // pred_region
    %v188 = vld [vmem:[#allocation2] sm:$0xff]
    %v189 = vld [vmem:[#allocation2 + $0x8] sm:$0xff]
    %v190 = vld [vmem:[#allocation2 + $0x10] sm:$0xff]
    %v191 = vld [vmem:[#allocation2 + $0x18] sm:$0xff]
    %v192 = vld [vmem:[#allocation2 + $0x20] sm:$0xff]
    %v193 = vld [vmem:[#allocation2 + $0x28] sm:$0xff]
    %v194 = vld [vmem:[#allocation2 + $0x30] sm:$0xff]
    %v195 = vld [vmem:[#allocation2 + $0x38] sm:$0xff]
    %v196 = vld [vmem:[#allocation2 + $0x40] sm:$0xff]
    %v197 = vld [vmem:[#allocation2 + $0x48] sm:$0xff]
    %v198 = vld [vmem:[#allocation2 + $0x50] sm:$0xff]
    %v199 = vld [vmem:[#allocation2 + $0x58] sm:$0xff]
    %v200 = vld [vmem:[#allocation2 + $0x60] sm:$0xff]
    %v201 = vld [vmem:[#allocation2 + $0x68] sm:$0xff]
    %v202 = vld [vmem:[#allocation2 + $0x70] sm:$0xff]
    %v203 = vld [vmem:[#allocation2 + $0x78] sm:$0xff]
    %v204 = vld [vmem:[%s2] sm:$0x1]
    %v206 = vperm.slane %v204, 0
    %v208 = vadd.f32 %v188, %v206
    %v209 = vadd.f32 %v189, %v206
    %v210 = vadd.f32 %v190, %v206
    %v211 = vadd.f32 %v191, %v206
    %v212 = vadd.f32 %v192, %v206
    %v213 = vadd.f32 %v193, %v206
    %v214 = vadd.f32 %v194, %v206
    %v215 = vadd.f32 %v195, %v206
    %v216 = vadd.f32 %v196, %v206
    %v217 = vadd.f32 %v197, %v206
    %v218 = vadd.f32 %v198, %v206
    %v219 = vadd.f32 %v199, %v206
    %v220 = vadd.f32 %v200, %v206
    %v221 = vadd.f32 %v201, %v206
    %v222 = vadd.f32 %v202, %v206
    %v223 = vadd.f32 %v203, %v206
    %v224 = vmul.f32 %v208, 0.5
    %v225 = vmul.f32 %v209, 0.5
    %v226 = vmul.f32 %v210, 0.5
    %v227 = vmul.f32 %v211, 0.5
    %v228 = vmul.f32 %v212, 0.5
    %v229 = vmul.f32 %v213, 0.5
    %v230 = vmul.f32 %v214, 0.5
    %v231 = vmul.f32 %v215, 0.5
    %v232 = vmul.f32 %v216, 0.5
    %v233 = vmul.f32 %v217, 0.5
    %v234 = vmul.f32 %v218, 0.5
    %v235 = vmul.f32 %v219, 0.5
    %v236 = vmul.f32 %v220, 0.5
    %v237 = vmul.f32 %v221, 0.5
    %v238 = vmul.f32 %v222, 0.5
    %v239 = vmul.f32 %v223, 0.5
    %v240 = vmul.f32 %v208, 0.70710677
    %v241 = vmul.f32 %v209, 0.70710677
    %v242 = vmul.f32 %v210, 0.70710677
    %v243 = vmul.f32 %v211, 0.70710677
    %v244 = vmul.f32 %v212, 0.70710677
    %v245 = vmul.f32 %v213, 0.70710677
    %v246 = vmul.f32 %v214, 0.70710677
    %v247 = vmul.f32 %v215, 0.70710677
    %v248 = vmul.f32 %v216, 0.70710677
    %v249 = vmul.f32 %v217, 0.70710677
    %v250 = vmul.f32 %v218, 0.70710677
    %v251 = vmul.f32 %v219, 0.70710677
    %v252 = vmul.f32 %v220, 0.70710677
    %v253 = vmul.f32 %v221, 0.70710677
    %v254 = vmul.f32 %v222, 0.70710677
    %v255 = vmul.f32 %v223, 0.70710677
    %v256 = vand.u32 2147483647, %v240
    %v257 = vand.u32 2147483647, %v241
    %v258 = vand.u32 2147483647, %v242
    %v259 = vand.u32 2147483647, %v243
    %v260 = vand.u32 2147483647, %v244
    %v261 = vand.u32 2147483647, %v245
    %v262 = vand.u32 2147483647, %v246
    %v263 = vand.u32 2147483647, %v247
    %v264 = vand.u32 2147483647, %v248
    %v265 = vand.u32 2147483647, %v249
    %v266 = vand.u32 2147483647, %v250
    %v267 = vand.u32 2147483647, %v251
    %v268 = vand.u32 2147483647, %v252
    %v269 = vand.u32 2147483647, %v253
    %v270 = vand.u32 2147483647, %v254
    %v271 = vand.u32 2147483647, %v255
    %v272 = vmul.f32 %v256, 0.3275911
    %v273 = vmul.f32 %v257, 0.3275911
    %v274 = vmul.f32 %v258, 0.3275911
    %v275 = vmul.f32 %v259, 0.3275911
    %v276 = vmul.f32 %v260, 0.3275911
    %v277 = vmul.f32 %v261, 0.3275911
    %v278 = vmul.f32 %v262, 0.3275911
    %v279 = vmul.f32 %v263, 0.3275911
    %v280 = vmul.f32 %v264, 0.3275911
    %v281 = vmul.f32 %v265, 0.3275911
    %v282 = vmul.f32 %v266, 0.3275911
    %v283 = vmul.f32 %v267, 0.3275911
    %v284 = vmul.f32 %v268, 0.3275911
    %v285 = vmul.f32 %v269, 0.3275911
    %v286 = vmul.f32 %v270, 0.3275911
    %v287 = vmul.f32 %v271, 0.3275911
    %v288 = vadd.f32 %v272, 1.0
    %v289 = vadd.f32 %v273, 1.0
    %v290 = vadd.f32 %v274, 1.0
    %v291 = vadd.f32 %v275, 1.0
    %v292 = vadd.f32 %v276, 1.0
    %v293 = vadd.f32 %v277, 1.0
    %v294 = vadd.f32 %v278, 1.0
    %v295 = vadd.f32 %v279, 1.0
    %v296 = vadd.f32 %v280, 1.0
    %v297 = vadd.f32 %v281, 1.0
    %v298 = vadd.f32 %v282, 1.0
    %v299 = vadd.f32 %v283, 1.0
    %v300 = vadd.f32 %v284, 1.0
    %v301 = vadd.f32 %v285, 1.0
    %v302 = vadd.f32 %v286, 1.0
    %v303 = vadd.f32 %v287, 1.0
    %v304 = vrcp.pop %v288
    %v305 = vmul.f32 %v288, %v304
    %v306 = vsub.f32 1.0, %v305
    %v307 = vmul.f32 %v304, %v306
    %v308 = vadd.f32 %v304, %v307
    %vm309 = vweird.f32 %v288
    %vm310 = vweird.f32 %v304
    %vm311 = vmor %vm309, %vm310
    %v312 = vsel %vm311, %v304, %v308
    %v313 = vand.u32 2147483647, %v288
    %vm314 = vcmp.eq.f32.partialorder %v313, 8.507059e+37
    %v315 = vand.u32 %v288, 2147483648
    %v316 = vor.u32 1.1754944e-38, %v315
    %v317 = vsel %vm314, %v316, %v312
    %v318 = vmul.f32 1.0, %v317
    %v319 = vrcp.pop %v289
    %v320 = vmul.f32 %v289, %v319
    %v321 = vsub.f32 1.0, %v320
    %v322 = vmul.f32 %v319, %v321
    %v323 = vadd.f32 %v319, %v322
    %vm324 = vweird.f32 %v289
    %vm325 = vweird.f32 %v319
    %vm326 = vmor %vm324, %vm325
    %v327 = vsel %vm326, %v319, %v323
    %v328 = vand.u32 2147483647, %v289
    %vm329 = vcmp.eq.f32.partialorder %v328, 8.507059e+37
    %v330 = vand.u32 %v289, 2147483648
    %v331 = vor.u32 1.1754944e-38, %v330
    %v332 = vsel %vm329, %v331, %v327
    %v333 = vmul.f32 1.0, %v332
    %v334 = vrcp.pop %v290
    %v335 = vmul.f32 %v290, %v334
    %v336 = vsub.f32 1.0, %v335
    %v337 = vmul.f32 %v334, %v336
    %v338 = vadd.f32 %v334, %v337
    %vm339 = vweird.f32 %v290
    %vm340 = vweird.f32 %v334
    %vm341 = vmor %vm339, %vm340
    %v342 = vsel %vm341, %v334, %v338
    %v343 = vand.u32 2147483647, %v290
    %vm344 = vcmp.eq.f32.partialorder %v343, 8.507059e+37
    %v345 = vand.u32 %v290, 2147483648
    %v346 = vor.u32 1.1754944e-38, %v345
    %v347 = vsel %vm344, %v346, %v342
    %v348 = vmul.f32 1.0, %v347
    %v349 = vrcp.pop %v291
    %v350 = vmul.f32 %v291, %v349
    %v351 = vsub.f32 1.0, %v350
    %v352 = vmul.f32 %v349, %v351
    %v353 = vadd.f32 %v349, %v352
    %vm354 = vweird.f32 %v291
    %vm355 = vweird.f32 %v349
    %vm356 = vmor %vm354, %vm355
    %v357 = vsel %vm356, %v349, %v353
    %v358 = vand.u32 2147483647, %v291
    %vm359 = vcmp.eq.f32.partialorder %v358, 8.507059e+37
    %v360 = vand.u32 %v291, 2147483648
    %v361 = vor.u32 1.1754944e-38, %v360
    %v362 = vsel %vm359, %v361, %v357
    %v363 = vmul.f32 1.0, %v362
    %v364 = vrcp.pop %v292
    %v365 = vmul.f32 %v292, %v364
    %v366 = vsub.f32 1.0, %v365
    %v367 = vmul.f32 %v364, %v366
    %v368 = vadd.f32 %v364, %v367
    %vm369 = vweird.f32 %v292
    %vm370 = vweird.f32 %v364
    %vm371 = vmor %vm369, %vm370
    %v372 = vsel %vm371, %v364, %v368
    %v373 = vand.u32 2147483647, %v292
    %vm374 = vcmp.eq.f32.partialorder %v373, 8.507059e+37
    %v375 = vand.u32 %v292, 2147483648
    %v376 = vor.u32 1.1754944e-38, %v375
    %v377 = vsel %vm374, %v376, %v372
    %v378 = vmul.f32 1.0, %v377
    %v379 = vrcp.pop %v293
    %v380 = vmul.f32 %v293, %v379
    %v381 = vsub.f32 1.0, %v380
    %v382 = vmul.f32 %v379, %v381
    %v383 = vadd.f32 %v379, %v382
    %vm384 = vweird.f32 %v293
    %vm385 = vweird.f32 %v379
    %vm386 = vmor %vm384, %vm385
    %v387 = vsel %vm386, %v379, %v383
    %v388 = vand.u32 2147483647, %v293
    %vm389 = vcmp.eq.f32.partialorder %v388, 8.507059e+37
    %v390 = vand.u32 %v293, 2147483648
    %v391 = vor.u32 1.1754944e-38, %v390
    %v392 = vsel %vm389, %v391, %v387
    %v393 = vmul.f32 1.0, %v392
    %v394 = vrcp.pop %v294
    %v395 = vmul.f32 %v294, %v394
    %v396 = vsub.f32 1.0, %v395
    %v397 = vmul.f32 %v394, %v396
    %v398 = vadd.f32 %v394, %v397
    %vm399 = vweird.f32 %v294
    %vm400 = vweird.f32 %v394
    %vm401 = vmor %vm399, %vm400
    %v402 = vsel %vm401, %v394, %v398
    %v403 = vand.u32 2147483647, %v294
    %vm404 = vcmp.eq.f32.partialorder %v403, 8.507059e+37
    %v405 = vand.u32 %v294, 2147483648
    %v406 = vor.u32 1.1754944e-38, %v405
    %v407 = vsel %vm404, %v406, %v402
    %v408 = vmul.f32 1.0, %v407
    %v409 = vrcp.pop %v295
    %v410 = vmul.f32 %v295, %v409
    %v411 = vsub.f32 1.0, %v410
    %v412 = vmul.f32 %v409, %v411
    %v413 = vadd.f32 %v409, %v412
    %vm414 = vweird.f32 %v295
    %vm415 = vweird.f32 %v409
    %vm416 = vmor %vm414, %vm415
    %v417 = vsel %vm416, %v409, %v413
    %v418 = vand.u32 2147483647, %v295
    %vm419 = vcmp.eq.f32.partialorder %v418, 8.507059e+37
    %v420 = vand.u32 %v295, 2147483648
    %v421 = vor.u32 1.1754944e-38, %v420
    %v422 = vsel %vm419, %v421, %v417
    %v423 = vmul.f32 1.0, %v422
    %v424 = vrcp.pop %v296
    %v425 = vmul.f32 %v296, %v424
    %v426 = vsub.f32 1.0, %v425
    %v427 = vmul.f32 %v424, %v426
    %v428 = vadd.f32 %v424, %v427
    %vm429 = vweird.f32 %v296
    %vm430 = vweird.f32 %v424
    %vm431 = vmor %vm429, %vm430
    %v432 = vsel %vm431, %v424, %v428
    %v433 = vand.u32 2147483647, %v296
    %vm434 = vcmp.eq.f32.partialorder %v433, 8.507059e+37
    %v435 = vand.u32 %v296, 2147483648
    %v436 = vor.u32 1.1754944e-38, %v435
    %v437 = vsel %vm434, %v436, %v432
    %v438 = vmul.f32 1.0, %v437
    %v439 = vrcp.pop %v297
    %v440 = vmul.f32 %v297, %v439
    %v441 = vsub.f32 1.0, %v440
    %v442 = vmul.f32 %v439, %v441
    %v443 = vadd.f32 %v439, %v442
    %vm444 = vweird.f32 %v297
    %vm445 = vweird.f32 %v439
    %vm446 = vmor %vm444, %vm445
    %v447 = vsel %vm446, %v439, %v443
    %v448 = vand.u32 2147483647, %v297
    %vm449 = vcmp.eq.f32.partialorder %v448, 8.507059e+37
    %v450 = vand.u32 %v297, 2147483648
    %v451 = vor.u32 1.1754944e-38, %v450
    %v452 = vsel %vm449, %v451, %v447
    %v453 = vmul.f32 1.0, %v452
    %v454 = vrcp.pop %v298
    %v455 = vmul.f32 %v298, %v454
    %v456 = vsub.f32 1.0, %v455
    %v457 = vmul.f32 %v454, %v456
    %v458 = vadd.f32 %v454, %v457
    %vm459 = vweird.f32 %v298
    %vm460 = vweird.f32 %v454
    %vm461 = vmor %vm459, %vm460
    %v462 = vsel %vm461, %v454, %v458
    %v463 = vand.u32 2147483647, %v298
    %vm464 = vcmp.eq.f32.partialorder %v463, 8.507059e+37
    %v465 = vand.u32 %v298, 2147483648
    %v466 = vor.u32 1.1754944e-38, %v465
    %v467 = vsel %vm464, %v466, %v462
    %v468 = vmul.f32 1.0, %v467
    %v469 = vrcp.pop %v299
    %v470 = vmul.f32 %v299, %v469
    %v471 = vsub.f32 1.0, %v470
    %v472 = vmul.f32 %v469, %v471
    %v473 = vadd.f32 %v469, %v472
    %vm474 = vweird.f32 %v299
    %vm475 = vweird.f32 %v469
    %vm476 = vmor %vm474, %vm475
    %v477 = vsel %vm476, %v469, %v473
    %v478 = vand.u32 2147483647, %v299
    %vm479 = vcmp.eq.f32.partialorder %v478, 8.507059e+37
    %v480 = vand.u32 %v299, 2147483648
    %v481 = vor.u32 1.1754944e-38, %v480
    %v482 = vsel %vm479, %v481, %v477
    %v483 = vmul.f32 1.0, %v482
    %v484 = vrcp.pop %v300
    %v485 = vmul.f32 %v300, %v484
    %v486 = vsub.f32 1.0, %v485
    %v487 = vmul.f32 %v484, %v486
    %v488 = vadd.f32 %v484, %v487
    %vm489 = vweird.f32 %v300
    %vm490 = vweird.f32 %v484
    %vm491 = vmor %vm489, %vm490
    %v492 = vsel %vm491, %v484, %v488
    %v493 = vand.u32 2147483647, %v300
    %vm494 = vcmp.eq.f32.partialorder %v493, 8.507059e+37
    %v495 = vand.u32 %v300, 2147483648
    %v496 = vor.u32 1.1754944e-38, %v495
    %v497 = vsel %vm494, %v496, %v492
    %v498 = vmul.f32 1.0, %v497
    %v499 = vrcp.pop %v301
    %v500 = vmul.f32 %v301, %v499
    %v501 = vsub.f32 1.0, %v500
    %v502 = vmul.f32 %v499, %v501
    %v503 = vadd.f32 %v499, %v502
    %vm504 = vweird.f32 %v301
    %vm505 = vweird.f32 %v499
    %vm506 = vmor %vm504, %vm505
    %v507 = vsel %vm506, %v499, %v503
    %v508 = vand.u32 2147483647, %v301
    %vm509 = vcmp.eq.f32.partialorder %v508, 8.507059e+37
    %v510 = vand.u32 %v301, 2147483648
    %v511 = vor.u32 1.1754944e-38, %v510
    %v512 = vsel %vm509, %v511, %v507
    %v513 = vmul.f32 1.0, %v512
    %v514 = vrcp.pop %v302
    %v515 = vmul.f32 %v302, %v514
    %v516 = vsub.f32 1.0, %v515
    %v517 = vmul.f32 %v514, %v516
    %v518 = vadd.f32 %v514, %v517
    %vm519 = vweird.f32 %v302
    %vm520 = vweird.f32 %v514
    %vm521 = vmor %vm519, %vm520
    %v522 = vsel %vm521, %v514, %v518
    %v523 = vand.u32 2147483647, %v302
    %vm524 = vcmp.eq.f32.partialorder %v523, 8.507059e+37
    %v525 = vand.u32 %v302, 2147483648
    %v526 = vor.u32 1.1754944e-38, %v525
    %v527 = vsel %vm524, %v526, %v522
    %v528 = vmul.f32 1.0, %v527
    %v529 = vrcp.pop %v303
    %v530 = vmul.f32 %v303, %v529
    %v531 = vsub.f32 1.0, %v530
    %v532 = vmul.f32 %v529, %v531
    %v533 = vadd.f32 %v529, %v532
    %vm534 = vweird.f32 %v303
    %vm535 = vweird.f32 %v529
    %vm536 = vmor %vm534, %vm535
    %v537 = vsel %vm536, %v529, %v533
    %v538 = vand.u32 2147483647, %v303
    %vm539 = vcmp.eq.f32.partialorder %v538, 8.507059e+37
    %v540 = vand.u32 %v303, 2147483648
    %v541 = vor.u32 1.1754944e-38, %v540
    %v542 = vsel %vm539, %v541, %v537
    %v543 = vmul.f32 1.0, %v542
    %v544 = vmul.f32 %v318, 1.0614054
    %v545 = vmul.f32 %v333, 1.0614054
    %v546 = vmul.f32 %v348, 1.0614054
    %v547 = vmul.f32 %v363, 1.0614054
    %v548 = vmul.f32 %v378, 1.0614054
    %v549 = vmul.f32 %v393, 1.0614054
    %v550 = vmul.f32 %v408, 1.0614054
    %v551 = vmul.f32 %v423, 1.0614054
    %v552 = vmul.f32 %v438, 1.0614054
    %v553 = vmul.f32 %v453, 1.0614054
    %v554 = vmul.f32 %v468, 1.0614054
    %v555 = vmul.f32 %v483, 1.0614054
    %v556 = vmul.f32 %v498, 1.0614054
    %v557 = vmul.f32 %v513, 1.0614054
    %v558 = vmul.f32 %v528, 1.0614054
    %v559 = vmul.f32 %v543, 1.0614054
    %v560 = vadd.f32 %v544, -1.4531521
    %v561 = vadd.f32 %v545, -1.4531521
    %v562 = vadd.f32 %v546, -1.4531521
    %v563 = vadd.f32 %v547, -1.4531521
    %v564 = vadd.f32 %v548, -1.4531521
    %v565 = vadd.f32 %v549, -1.4531521
    %v566 = vadd.f32 %v550, -1.4531521
    %v567 = vadd.f32 %v551, -1.4531521
    %v568 = vadd.f32 %v552, -1.4531521
    %v569 = vadd.f32 %v553, -1.4531521
    %v570 = vadd.f32 %v554, -1.4531521
    %v571 = vadd.f32 %v555, -1.4531521
    %v572 = vadd.f32 %v556, -1.4531521
    %v573 = vadd.f32 %v557, -1.4531521
    %v574 = vadd.f32 %v558, -1.4531521
    %v575 = vadd.f32 %v559, -1.4531521
    %v576 = vmul.f32 %v560, %v318
    %v577 = vmul.f32 %v561, %v333
    %v578 = vmul.f32 %v562, %v348
    %v579 = vmul.f32 %v563, %v363
    %v580 = vmul.f32 %v564, %v378
    %v581 = vmul.f32 %v565, %v393
    %v582 = vmul.f32 %v566, %v408
    %v583 = vmul.f32 %v567, %v423
    %v584 = vmul.f32 %v568, %v438
    %v585 = vmul.f32 %v569, %v453
    %v586 = vmul.f32 %v570, %v468
    %v587 = vmul.f32 %v571, %v483
    %v588 = vmul.f32 %v572, %v498
    %v589 = vmul.f32 %v573, %v513
    %v590 = vmul.f32 %v574, %v528
    %v591 = vmul.f32 %v575, %v543
    %v592 = vadd.f32 %v576, 1.4214138
    %v593 = vadd.f32 %v577, 1.4214138
    %v594 = vadd.f32 %v578, 1.4214138
    %v595 = vadd.f32 %v579, 1.4214138
    %v596 = vadd.f32 %v580, 1.4214138
    %v597 = vadd.f32 %v581, 1.4214138
    %v598 = vadd.f32 %v582, 1.4214138
    %v599 = vadd.f32 %v583, 1.4214138
    %v600 = vadd.f32 %v584, 1.4214138
    %v601 = vadd.f32 %v585, 1.4214138
    %v602 = vadd.f32 %v586, 1.4214138
    %v603 = vadd.f32 %v587, 1.4214138
    %v604 = vadd.f32 %v588, 1.4214138
    %v605 = vadd.f32 %v589, 1.4214138
    %v606 = vadd.f32 %v590, 1.4214138
    %v607 = vadd.f32 %v591, 1.4214138
    %v608 = vmul.f32 %v592, %v318
    %v609 = vmul.f32 %v593, %v333
    %v610 = vmul.f32 %v594, %v348
    %v611 = vmul.f32 %v595, %v363
    %v612 = vmul.f32 %v596, %v378
    %v613 = vmul.f32 %v597, %v393
    %v614 = vmul.f32 %v598, %v408
    %v615 = vmul.f32 %v599, %v423
    %v616 = vmul.f32 %v600, %v438
    %v617 = vmul.f32 %v601, %v453
    %v618 = vmul.f32 %v602, %v468
    %v619 = vmul.f32 %v603, %v483
    %v620 = vmul.f32 %v604, %v498
    %v621 = vmul.f32 %v605, %v513
    %v622 = vmul.f32 %v606, %v528
    %v623 = vmul.f32 %v607, %v543
    %v624 = vadd.f32 %v608, -0.28449672
    %v625 = vadd.f32 %v609, -0.28449672
    %v626 = vadd.f32 %v610, -0.28449672
    %v627 = vadd.f32 %v611, -0.28449672
    %v628 = vadd.f32 %v612, -0.28449672
    %v629 = vadd.f32 %v613, -0.28449672
    %v630 = vadd.f32 %v614, -0.28449672
    %v631 = vadd.f32 %v615, -0.28449672
    %v632 = vadd.f32 %v616, -0.28449672
    %v633 = vadd.f32 %v617, -0.28449672
    %v634 = vadd.f32 %v618, -0.28449672
    %v635 = vadd.f32 %v619, -0.28449672
    %v636 = vadd.f32 %v620, -0.28449672
    %v637 = vadd.f32 %v621, -0.28449672
    %v638 = vadd.f32 %v622, -0.28449672
    %v639 = vadd.f32 %v623, -0.28449672
    %v640 = vmul.f32 %v624, %v318
    %v641 = vmul.f32 %v625, %v333
    %v642 = vmul.f32 %v626, %v348
    %v643 = vmul.f32 %v627, %v363
    %v644 = vmul.f32 %v628, %v378
    %v645 = vmul.f32 %v629, %v393
    %v646 = vmul.f32 %v630, %v408
    %v647 = vmul.f32 %v631, %v423
    %v648 = vmul.f32 %v632, %v438
    %v649 = vmul.f32 %v633, %v453
    %v650 = vmul.f32 %v634, %v468
    %v651 = vmul.f32 %v635, %v483
    %v652 = vmul.f32 %v636, %v498
    %v653 = vmul.f32 %v637, %v513
    %v654 = vmul.f32 %v638, %v528
    %v655 = vmul.f32 %v639, %v543
    %v656 = vadd.f32 %v640, 0.2548296
    %v657 = vadd.f32 %v641, 0.2548296
    %v658 = vadd.f32 %v642, 0.2548296
    %v659 = vadd.f32 %v643, 0.2548296
    %v660 = vadd.f32 %v644, 0.2548296
    %v661 = vadd.f32 %v645, 0.2548296
    %v662 = vadd.f32 %v646, 0.2548296
    %v663 = vadd.f32 %v647, 0.2548296
    %v664 = vadd.f32 %v648, 0.2548296
    %v665 = vadd.f32 %v649, 0.2548296
    %v666 = vadd.f32 %v650, 0.2548296
    %v667 = vadd.f32 %v651, 0.2548296
    %v668 = vadd.f32 %v652, 0.2548296
    %v669 = vadd.f32 %v653, 0.2548296
    %v670 = vadd.f32 %v654, 0.2548296
    %v671 = vadd.f32 %v655, 0.2548296
    %v672 = vmul.f32 %v656, %v318
    %v673 = vmul.f32 %v657, %v333
    %v674 = vmul.f32 %v658, %v348
    %v675 = vmul.f32 %v659, %v363
    %v676 = vmul.f32 %v660, %v378
    %v677 = vmul.f32 %v661, %v393
    %v678 = vmul.f32 %v662, %v408
    %v679 = vmul.f32 %v663, %v423
    %v680 = vmul.f32 %v664, %v438
    %v681 = vmul.f32 %v665, %v453
    %v682 = vmul.f32 %v666, %v468
    %v683 = vmul.f32 %v667, %v483
    %v684 = vmul.f32 %v668, %v498
    %v685 = vmul.f32 %v669, %v513
    %v686 = vmul.f32 %v670, %v528
    %v687 = vmul.f32 %v671, %v543
    %v688 = vsub.f32 0.0, %v256
    %v689 = vsub.f32 0.0, %v257
    %v690 = vsub.f32 0.0, %v258
    %v691 = vsub.f32 0.0, %v259
    %v692 = vsub.f32 0.0, %v260
    %v693 = vsub.f32 0.0, %v261
    %v694 = vsub.f32 0.0, %v262
    %v695 = vsub.f32 0.0, %v263
    %v696 = vsub.f32 0.0, %v264
    %v697 = vsub.f32 0.0, %v265
    %v698 = vsub.f32 0.0, %v266
    %v699 = vsub.f32 0.0, %v267
    %v700 = vsub.f32 0.0, %v268
    %v701 = vsub.f32 0.0, %v269
    %v702 = vsub.f32 0.0, %v270
    %v703 = vsub.f32 0.0, %v271
    %v704 = vmul.f32 %v688, %v256
    %v705 = vmul.f32 %v689, %v257
    %v706 = vmul.f32 %v690, %v258
    %v707 = vmul.f32 %v691, %v259
    %v708 = vmul.f32 %v692, %v260
    %v709 = vmul.f32 %v693, %v261
    %v710 = vmul.f32 %v694, %v262
    %v711 = vmul.f32 %v695, %v263
    %v712 = vmul.f32 %v696, %v264
    %v713 = vmul.f32 %v697, %v265
    %v714 = vmul.f32 %v698, %v266
    %v715 = vmul.f32 %v699, %v267
    %v716 = vmul.f32 %v700, %v268
    %v717 = vmul.f32 %v701, %v269
    %v718 = vmul.f32 %v702, %v270
    %v719 = vmul.f32 %v703, %v271
    %v720 = vmul.f32 %v704, 1.442695
    %v721 = vpow.pop %v720
    %v722 = vmul.f32 %v705, 1.442695
    %v723 = vpow.pop %v722
    %v724 = vmul.f32 %v706, 1.442695
    %v725 = vpow.pop %v724
    %v726 = vmul.f32 %v707, 1.442695
    %v727 = vpow.pop %v726
    %v728 = vmul.f32 %v708, 1.442695
    %v729 = vpow.pop %v728
    %v730 = vmul.f32 %v709, 1.442695
    %v731 = vpow.pop %v730
    %v732 = vmul.f32 %v710, 1.442695
    %v733 = vpow.pop %v732
    %v734 = vmul.f32 %v711, 1.442695
    %v735 = vpow.pop %v734
    %v736 = vmul.f32 %v712, 1.442695
    %v737 = vpow.pop %v736
    %v738 = vmul.f32 %v713, 1.442695
    %v739 = vpow.pop %v738
    %v740 = vmul.f32 %v714, 1.442695
    %v741 = vpow.pop %v740
    %v742 = vmul.f32 %v715, 1.442695
    %v743 = vpow.pop %v742
    %v744 = vmul.f32 %v716, 1.442695
    %v745 = vpow.pop %v744
    %v746 = vmul.f32 %v717, 1.442695
    %v747 = vpow.pop %v746
    %v748 = vmul.f32 %v718, 1.442695
    %v749 = vpow.pop %v748
    %v750 = vmul.f32 %v719, 1.442695
    %v751 = vpow.pop %v750
    %v752 = vmul.f32 %v672, %v721
    %v753 = vmul.f32 %v673, %v723
    %v754 = vmul.f32 %v674, %v725
    %v755 = vmul.f32 %v675, %v727
    %v756 = vmul.f32 %v676, %v729
    %v757 = vmul.f32 %v677, %v731
    %v758 = vmul.f32 %v678, %v733
    %v759 = vmul.f32 %v679, %v735
    %v760 = vmul.f32 %v680, %v737
    %v761 = vmul.f32 %v681, %v739
    %v762 = vmul.f32 %v682, %v741
    %v763 = vmul.f32 %v683, %v743
    %v764 = vmul.f32 %v684, %v745
    %v765 = vmul.f32 %v685, %v747
    %v766 = vmul.f32 %v686, %v749
    %v767 = vmul.f32 %v687, %v751
    %v768 = vsub.f32 1.0, %v752
    %v769 = vsub.f32 1.0, %v753
    %v770 = vsub.f32 1.0, %v754
    %v771 = vsub.f32 1.0, %v755
    %v772 = vsub.f32 1.0, %v756
    %v773 = vsub.f32 1.0, %v757
    %v774 = vsub.f32 1.0, %v758
    %v775 = vsub.f32 1.0, %v759
    %v776 = vsub.f32 1.0, %v760
    %v777 = vsub.f32 1.0, %v761
    %v778 = vsub.f32 1.0, %v762
    %v779 = vsub.f32 1.0, %v763
    %v780 = vsub.f32 1.0, %v764
    %v781 = vsub.f32 1.0, %v765
    %v782 = vsub.f32 1.0, %v766
    %v783 = vsub.f32 1.0, %v767
    %vm784 = vcmp.ge.f32.partialorder %v240, 0.0
    %vm785 = vcmp.ge.f32.partialorder %v241, 0.0
    %vm786 = vcmp.ge.f32.partialorder %v242, 0.0
    %vm787 = vcmp.ge.f32.partialorder %v243, 0.0
    %vm788 = vcmp.ge.f32.partialorder %v244, 0.0
    %vm789 = vcmp.ge.f32.partialorder %v245, 0.0
    %vm790 = vcmp.ge.f32.partialorder %v246, 0.0
    %vm791 = vcmp.ge.f32.partialorder %v247, 0.0
    %vm792 = vcmp.ge.f32.partialorder %v248, 0.0
    %vm793 = vcmp.ge.f32.partialorder %v249, 0.0
    %vm794 = vcmp.ge.f32.partialorder %v250, 0.0
    %vm795 = vcmp.ge.f32.partialorder %v251, 0.0
    %vm796 = vcmp.ge.f32.partialorder %v252, 0.0
    %vm797 = vcmp.ge.f32.partialorder %v253, 0.0
    %vm798 = vcmp.ge.f32.partialorder %v254, 0.0
    %vm799 = vcmp.ge.f32.partialorder %v255, 0.0
    %v800 = vsub.f32 0.0, %v768
    %v801 = vsub.f32 0.0, %v769
    %v802 = vsub.f32 0.0, %v770
    %v803 = vsub.f32 0.0, %v771
    %v804 = vsub.f32 0.0, %v772
    %v805 = vsub.f32 0.0, %v773
    %v806 = vsub.f32 0.0, %v774
    %v807 = vsub.f32 0.0, %v775
    %v808 = vsub.f32 0.0, %v776
    %v809 = vsub.f32 0.0, %v777
    %v810 = vsub.f32 0.0, %v778
    %v811 = vsub.f32 0.0, %v779
    %v812 = vsub.f32 0.0, %v780
    %v813 = vsub.f32 0.0, %v781
    %v814 = vsub.f32 0.0, %v782
    %v815 = vsub.f32 0.0, %v783
    %v816 = vsel %vm784, %v768, %v800
    %v817 = vsel %vm785, %v769, %v801
    %v818 = vsel %vm786, %v770, %v802
    %v819 = vsel %vm787, %v771, %v803
    %v820 = vsel %vm788, %v772, %v804
    %v821 = vsel %vm789, %v773, %v805
    %v822 = vsel %vm790, %v774, %v806
    %v823 = vsel %vm791, %v775, %v807
    %v824 = vsel %vm792, %v776, %v808
    %v825 = vsel %vm793, %v777, %v809
    %v826 = vsel %vm794, %v778, %v810
    %v827 = vsel %vm795, %v779, %v811
    %v828 = vsel %vm796, %v780, %v812
    %v829 = vsel %vm797, %v781, %v813
    %v830 = vsel %vm798, %v782, %v814
    %v831 = vsel %vm799, %v783, %v815
    %v832 = vadd.f32 %v816, 1.0
    %v833 = vadd.f32 %v817, 1.0
    %v834 = vadd.f32 %v818, 1.0
    %v835 = vadd.f32 %v819, 1.0
    %v836 = vadd.f32 %v820, 1.0
    %v837 = vadd.f32 %v821, 1.0
    %v838 = vadd.f32 %v822, 1.0
    %v839 = vadd.f32 %v823, 1.0
    %v840 = vadd.f32 %v824, 1.0
    %v841 = vadd.f32 %v825, 1.0
    %v842 = vadd.f32 %v826, 1.0
    %v843 = vadd.f32 %v827, 1.0
    %v844 = vadd.f32 %v828, 1.0
    %v845 = vadd.f32 %v829, 1.0
    %v846 = vadd.f32 %v830, 1.0
    %v847 = vadd.f32 %v831, 1.0
    %v848 = vmul.f32 %v224, %v832
    %v849 = vmul.f32 %v225, %v833
    %v850 = vmul.f32 %v226, %v834
    %v851 = vmul.f32 %v227, %v835
    %v852 = vmul.f32 %v228, %v836
    %v853 = vmul.f32 %v229, %v837
    %v854 = vmul.f32 %v230, %v838
    %v855 = vmul.f32 %v231, %v839
    %v856 = vmul.f32 %v232, %v840
    %v857 = vmul.f32 %v233, %v841
    %v858 = vmul.f32 %v234, %v842
    %v859 = vmul.f32 %v235, %v843
    %v860 = vmul.f32 %v236, %v844
    %v861 = vmul.f32 %v237, %v845
    %v862 = vmul.f32 %v238, %v846
    %v863 = vmul.f32 %v239, %v847
    %864 = vadd.xlane.f32.xlu0 %v848
    %v865 = vpop.xlane.xlu0 %864
    %866 = vadd.xlane.f32.xlu0 %v849
    %v867 = vpop.xlane.xlu0 %866
    %868 = vadd.xlane.f32.xlu0 %v850
    %v869 = vpop.xlane.xlu0 %868
    %870 = vadd.xlane.f32.xlu0 %v851
    %v871 = vpop.xlane.xlu0 %870
    %872 = vadd.xlane.f32.xlu0 %v852
    %v873 = vpop.xlane.xlu0 %872
    %874 = vadd.xlane.f32.xlu0 %v853
    %v875 = vpop.xlane.xlu0 %874
    %876 = vadd.xlane.f32.xlu0 %v854
    %v877 = vpop.xlane.xlu0 %876
    %878 = vadd.xlane.f32.xlu0 %v855
    %v879 = vpop.xlane.xlu0 %878
    %880 = vadd.xlane.f32.xlu0 %v856
    %v881 = vpop.xlane.xlu0 %880
    %882 = vadd.xlane.f32.xlu0 %v857
    %v883 = vpop.xlane.xlu0 %882
    %884 = vadd.xlane.f32.xlu0 %v858
    %v885 = vpop.xlane.xlu0 %884
    %886 = vadd.xlane.f32.xlu0 %v859
    %v887 = vpop.xlane.xlu0 %886
    %888 = vadd.xlane.f32.xlu0 %v860
    %v889 = vpop.xlane.xlu0 %888
    %890 = vadd.xlane.f32.xlu0 %v861
    %v891 = vpop.xlane.xlu0 %890
    %892 = vadd.xlane.f32.xlu0 %v862
    %v893 = vpop.xlane.xlu0 %892
    %894 = vadd.xlane.f32.xlu0 %v863
    %v895 = vpop.xlane.xlu0 %894
    %v896 = vmul.f32 %v865, 0.03125
    %v897 = vmul.f32 %v867, 0.03125
    %v898 = vmul.f32 %v869, 0.03125
    %v899 = vmul.f32 %v871, 0.03125
    %v900 = vmul.f32 %v873, 0.03125
    %v901 = vmul.f32 %v875, 0.03125
    %v902 = vmul.f32 %v877, 0.03125
    %v903 = vmul.f32 %v879, 0.03125
    %v904 = vmul.f32 %v881, 0.03125
    %v905 = vmul.f32 %v883, 0.03125
    %v906 = vmul.f32 %v885, 0.03125
    %v907 = vmul.f32 %v887, 0.03125
    %v908 = vmul.f32 %v889, 0.03125
    %v909 = vmul.f32 %v891, 0.03125
    %v910 = vmul.f32 %v893, 0.03125
    %v911 = vmul.f32 %v895, 0.03125
    %v912 = vmul.f32 %v848, %v848
    %v913 = vmul.f32 %v849, %v849
    %v914 = vmul.f32 %v850, %v850
    %v915 = vmul.f32 %v851, %v851
    %v916 = vmul.f32 %v852, %v852
    %v917 = vmul.f32 %v853, %v853
    %v918 = vmul.f32 %v854, %v854
    %v919 = vmul.f32 %v855, %v855
    %v920 = vmul.f32 %v856, %v856
    %v921 = vmul.f32 %v857, %v857
    %v922 = vmul.f32 %v858, %v858
    %v923 = vmul.f32 %v859, %v859
    %v924 = vmul.f32 %v860, %v860
    %v925 = vmul.f32 %v861, %v861
    %v926 = vmul.f32 %v862, %v862
    %v927 = vmul.f32 %v863, %v863
    %928 = vadd.xlane.f32.xlu0 %v912
    %v929 = vpop.xlane.xlu0 %928
    %930 = vadd.xlane.f32.xlu0 %v913
    %v931 = vpop.xlane.xlu0 %930
    %932 = vadd.xlane.f32.xlu0 %v914
    %v933 = vpop.xlane.xlu0 %932
    %934 = vadd.xlane.f32.xlu0 %v915
    %v935 = vpop.xlane.xlu0 %934
    %936 = vadd.xlane.f32.xlu0 %v916
    %v937 = vpop.xlane.xlu0 %936
    %938 = vadd.xlane.f32.xlu0 %v917
    %v939 = vpop.xlane.xlu0 %938
    %940 = vadd.xlane.f32.xlu0 %v918
    %v941 = vpop.xlane.xlu0 %940
    %942 = vadd.xlane.f32.xlu0 %v919
    %v943 = vpop.xlane.xlu0 %942
    %944 = vadd.xlane.f32.xlu0 %v920
    %v945 = vpop.xlane.xlu0 %944
    %946 = vadd.xlane.f32.xlu0 %v921
    %v947 = vpop.xlane.xlu0 %946
    %948 = vadd.xlane.f32.xlu0 %v922
    %v949 = vpop.xlane.xlu0 %948
    %950 = vadd.xlane.f32.xlu0 %v923
    %v951 = vpop.xlane.xlu0 %950
    %952 = vadd.xlane.f32.xlu0 %v924
    %v953 = vpop.xlane.xlu0 %952
    %954 = vadd.xlane.f32.xlu0 %v925
    %v955 = vpop.xlane.xlu0 %954
    %956 = vadd.xlane.f32.xlu0 %v926
    %v957 = vpop.xlane.xlu0 %956
    %958 = vadd.xlane.f32.xlu0 %v927
    %v959 = vpop.xlane.xlu0 %958
    %v960 = vmul.f32 %v929, 0.03125
    %v961 = vmul.f32 %v931, 0.03125
    %v962 = vmul.f32 %v933, 0.03125
    %v963 = vmul.f32 %v935, 0.03125
    %v964 = vmul.f32 %v937, 0.03125
    %v965 = vmul.f32 %v939, 0.03125
    %v966 = vmul.f32 %v941, 0.03125
    %v967 = vmul.f32 %v943, 0.03125
    %v968 = vmul.f32 %v945, 0.03125
    %v969 = vmul.f32 %v947, 0.03125
    %v970 = vmul.f32 %v949, 0.03125
    %v971 = vmul.f32 %v951, 0.03125
    %v972 = vmul.f32 %v953, 0.03125
    %v973 = vmul.f32 %v955, 0.03125
    %v974 = vmul.f32 %v957, 0.03125
    %v975 = vmul.f32 %v959, 0.03125
    %v976 = vmul.f32 %v896, %v896
    %v977 = vmul.f32 %v897, %v897
    %v978 = vmul.f32 %v898, %v898
    %v979 = vmul.f32 %v899, %v899
    %v980 = vmul.f32 %v900, %v900
    %v981 = vmul.f32 %v901, %v901
    %v982 = vmul.f32 %v902, %v902
    %v983 = vmul.f32 %v903, %v903
    %v984 = vmul.f32 %v904, %v904
    %v985 = vmul.f32 %v905, %v905
    %v986 = vmul.f32 %v906, %v906
    %v987 = vmul.f32 %v907, %v907
    %v988 = vmul.f32 %v908, %v908
    %v989 = vmul.f32 %v909, %v909
    %v990 = vmul.f32 %v910, %v910
    %v991 = vmul.f32 %v911, %v911
    %v992 = vsub.f32 %v960, %v976
    %v993 = vsub.f32 %v961, %v977
    %v994 = vsub.f32 %v962, %v978
    %v995 = vsub.f32 %v963, %v979
    %v996 = vsub.f32 %v964, %v980
    %v997 = vsub.f32 %v965, %v981
    %v998 = vsub.f32 %v966, %v982
    %v999 = vsub.f32 %v967, %v983
    %v1000 = vsub.f32 %v968, %v984
    %v1001 = vsub.f32 %v969, %v985
    %v1002 = vsub.f32 %v970, %v986
    %v1003 = vsub.f32 %v971, %v987
    %v1004 = vsub.f32 %v972, %v988
    %v1005 = vsub.f32 %v973, %v989
    %v1006 = vsub.f32 %v974, %v990
    %v1007 = vsub.f32 %v975, %v991
    %v1008 = vsub.f32 %v848, %v896
    %v1009 = vsub.f32 %v849, %v897
    %v1010 = vsub.f32 %v850, %v898
    %v1011 = vsub.f32 %v851, %v899
    %v1012 = vsub.f32 %v852, %v900
    %v1013 = vsub.f32 %v853, %v901
    %v1014 = vsub.f32 %v854, %v902
    %v1015 = vsub.f32 %v855, %v903
    %v1016 = vsub.f32 %v856, %v904
    %v1017 = vsub.f32 %v857, %v905
    %v1018 = vsub.f32 %v858, %v906
    %v1019 = vsub.f32 %v859, %v907
    %v1020 = vsub.f32 %v860, %v908
    %v1021 = vsub.f32 %v861, %v909
    %v1022 = vsub.f32 %v862, %v910
    %v1023 = vsub.f32 %v863, %v911
    %v1024 = vadd.f32 %v992, 1e-05
    %v1025 = vadd.f32 %v993, 1e-05
    %v1026 = vadd.f32 %v994, 1e-05
    %v1027 = vadd.f32 %v995, 1e-05
    %v1028 = vadd.f32 %v996, 1e-05
    %v1029 = vadd.f32 %v997, 1e-05
    %v1030 = vadd.f32 %v998, 1e-05
    %v1031 = vadd.f32 %v999, 1e-05
    %v1032 = vadd.f32 %v1000, 1e-05
    %v1033 = vadd.f32 %v1001, 1e-05
    %v1034 = vadd.f32 %v1002, 1e-05
    %v1035 = vadd.f32 %v1003, 1e-05
    %v1036 = vadd.f32 %v1004, 1e-05
    %v1037 = vadd.f32 %v1005, 1e-05
    %v1038 = vadd.f32 %v1006, 1e-05
    %v1039 = vadd.f32 %v1007, 1e-05
    %v1040 = vrsqrt.pop %v1024
    %v1041 = vmul.f32 %v1040, %v1024
    %v1042 = vmul.f32 %v1041, %v1040
    %v1043 = vmul.f32 0.5, %v1042
    %v1044 = vsub.f32 1.5, %v1043
    %v1045 = vmul.f32 %v1040, %v1044
    %vm1046 = vweird.f32 %v1024
    %vm1047 = vweird.f32 %v1040
    %vm1048 = vmor %vm1046, %vm1047
    %v1049 = vsel %vm1048, %v1040, %v1045
    %v1050 = vrsqrt.pop %v1025
    %v1051 = vmul.f32 %v1050, %v1025
    %v1052 = vmul.f32 %v1051, %v1050
    %v1053 = vmul.f32 0.5, %v1052
    %v1054 = vsub.f32 1.5, %v1053
    %v1055 = vmul.f32 %v1050, %v1054
    %vm1056 = vweird.f32 %v1025
    %vm1057 = vweird.f32 %v1050
    %vm1058 = vmor %vm1056, %vm1057
    %v1059 = vsel %vm1058, %v1050, %v1055
    %v1060 = vrsqrt.pop %v1026
    %v1061 = vmul.f32 %v1060, %v1026
    %v1062 = vmul.f32 %v1061, %v1060
    %v1063 = vmul.f32 0.5, %v1062
    %v1064 = vsub.f32 1.5, %v1063
    %v1065 = vmul.f32 %v1060, %v1064
    %vm1066 = vweird.f32 %v1026
    %vm1067 = vweird.f32 %v1060
    %vm1068 = vmor %vm1066, %vm1067
    %v1069 = vsel %vm1068, %v1060, %v1065
    %v1070 = vrsqrt.pop %v1027
    %v1071 = vmul.f32 %v1070, %v1027
    %v1072 = vmul.f32 %v1071, %v1070
    %v1073 = vmul.f32 0.5, %v1072
    %v1074 = vsub.f32 1.5, %v1073
    %v1075 = vmul.f32 %v1070, %v1074
    %vm1076 = vweird.f32 %v1027
    %vm1077 = vweird.f32 %v1070
    %vm1078 = vmor %vm1076, %vm1077
    %v1079 = vsel %vm1078, %v1070, %v1075
    %v1080 = vrsqrt.pop %v1028
    %v1081 = vmul.f32 %v1080, %v1028
    %v1082 = vmul.f32 %v1081, %v1080
    %v1083 = vmul.f32 0.5, %v1082
    %v1084 = vsub.f32 1.5, %v1083
    %v1085 = vmul.f32 %v1080, %v1084
    %vm1086 = vweird.f32 %v1028
    %vm1087 = vweird.f32 %v1080
    %vm1088 = vmor %vm1086, %vm1087
    %v1089 = vsel %vm1088, %v1080, %v1085
    %v1090 = vrsqrt.pop %v1029
    %v1091 = vmul.f32 %v1090, %v1029
    %v1092 = vmul.f32 %v1091, %v1090
    %v1093 = vmul.f32 0.5, %v1092
    %v1094 = vsub.f32 1.5, %v1093
    %v1095 = vmul.f32 %v1090, %v1094
    %vm1096 = vweird.f32 %v1029
    %vm1097 = vweird.f32 %v1090
    %vm1098 = vmor %vm1096, %vm1097
    %v1099 = vsel %vm1098, %v1090, %v1095
    %v1100 = vrsqrt.pop %v1030
    %v1101 = vmul.f32 %v1100, %v1030
    %v1102 = vmul.f32 %v1101, %v1100
    %v1103 = vmul.f32 0.5, %v1102
    %v1104 = vsub.f32 1.5, %v1103
    %v1105 = vmul.f32 %v1100, %v1104
    %vm1106 = vweird.f32 %v1030
    %vm1107 = vweird.f32 %v1100
    %vm1108 = vmor %vm1106, %vm1107
    %v1109 = vsel %vm1108, %v1100, %v1105
    %v1110 = vrsqrt.pop %v1031
    %v1111 = vmul.f32 %v1110, %v1031
    %v1112 = vmul.f32 %v1111, %v1110
    %v1113 = vmul.f32 0.5, %v1112
    %v1114 = vsub.f32 1.5, %v1113
    %v1115 = vmul.f32 %v1110, %v1114
    %vm1116 = vweird.f32 %v1031
    %vm1117 = vweird.f32 %v1110
    %vm1118 = vmor %vm1116, %vm1117
    %v1119 = vsel %vm1118, %v1110, %v1115
    %v1120 = vrsqrt.pop %v1032
    %v1121 = vmul.f32 %v1120, %v1032
    %v1122 = vmul.f32 %v1121, %v1120
    %v1123 = vmul.f32 0.5, %v1122
    %v1124 = vsub.f32 1.5, %v1123
    %v1125 = vmul.f32 %v1120, %v1124
    %vm1126 = vweird.f32 %v1032
    %vm1127 = vweird.f32 %v1120
    %vm1128 = vmor %vm1126, %vm1127
    %v1129 = vsel %vm1128, %v1120, %v1125
    %v1130 = vrsqrt.pop %v1033
    %v1131 = vmul.f32 %v1130, %v1033
    %v1132 = vmul.f32 %v1131, %v1130
    %v1133 = vmul.f32 0.5, %v1132
    %v1134 = vsub.f32 1.5, %v1133
    %v1135 = vmul.f32 %v1130, %v1134
    %vm1136 = vweird.f32 %v1033
    %vm1137 = vweird.f32 %v1130
    %vm1138 = vmor %vm1136, %vm1137
    %v1139 = vsel %vm1138, %v1130, %v1135
    %v1140 = vrsqrt.pop %v1034
    %v1141 = vmul.f32 %v1140, %v1034
    %v1142 = vmul.f32 %v1141, %v1140
    %v1143 = vmul.f32 0.5, %v1142
    %v1144 = vsub.f32 1.5, %v1143
    %v1145 = vmul.f32 %v1140, %v1144
    %vm1146 = vweird.f32 %v1034
    %vm1147 = vweird.f32 %v1140
    %vm1148 = vmor %vm1146, %vm1147
    %v1149 = vsel %vm1148, %v1140, %v1145
    %v1150 = vrsqrt.pop %v1035
    %v1151 = vmul.f32 %v1150, %v1035
    %v1152 = vmul.f32 %v1151, %v1150
    %v1153 = vmul.f32 0.5, %v1152
    %v1154 = vsub.f32 1.5, %v1153
    %v1155 = vmul.f32 %v1150, %v1154
    %vm1156 = vweird.f32 %v1035
    %vm1157 = vweird.f32 %v1150
    %vm1158 = vmor %vm1156, %vm1157
    %v1159 = vsel %vm1158, %v1150, %v1155
    %v1160 = vrsqrt.pop %v1036
    %v1161 = vmul.f32 %v1160, %v1036
    %v1162 = vmul.f32 %v1161, %v1160
    %v1163 = vmul.f32 0.5, %v1162
    %v1164 = vsub.f32 1.5, %v1163
    %v1165 = vmul.f32 %v1160, %v1164
    %vm1166 = vweird.f32 %v1036
    %vm1167 = vweird.f32 %v1160
    %vm1168 = vmor %vm1166, %vm1167
    %v1169 = vsel %vm1168, %v1160, %v1165
    %v1170 = vrsqrt.pop %v1037
    %v1171 = vmul.f32 %v1170, %v1037
    %v1172 = vmul.f32 %v1171, %v1170
    %v1173 = vmul.f32 0.5, %v1172
    %v1174 = vsub.f32 1.5, %v1173
    %v1175 = vmul.f32 %v1170, %v1174
    %vm1176 = vweird.f32 %v1037
    %vm1177 = vweird.f32 %v1170
    %vm1178 = vmor %vm1176, %vm1177
    %v1179 = vsel %vm1178, %v1170, %v1175
    %v1180 = vrsqrt.pop %v1038
    %v1181 = vmul.f32 %v1180, %v1038
    %v1182 = vmul.f32 %v1181, %v1180
    %v1183 = vmul.f32 0.5, %v1182
    %v1184 = vsub.f32 1.5, %v1183
    %v1185 = vmul.f32 %v1180, %v1184
    %vm1186 = vweird.f32 %v1038
    %vm1187 = vweird.f32 %v1180
    %vm1188 = vmor %vm1186, %vm1187
    %v1189 = vsel %vm1188, %v1180, %v1185
    %v1190 = vrsqrt.pop %v1039
    %v1191 = vmul.f32 %v1190, %v1039
    %v1192 = vmul.f32 %v1191, %v1190
    %v1193 = vmul.f32 0.5, %v1192
    %v1194 = vsub.f32 1.5, %v1193
    %v1195 = vmul.f32 %v1190, %v1194
    %vm1196 = vweird.f32 %v1039
    %vm1197 = vweird.f32 %v1190
    %vm1198 = vmor %vm1196, %vm1197
    %v1199 = vsel %vm1198, %v1190, %v1195
    %v1200 = vmul.f32 %v1008, %v1049
    %v1201 = vmul.f32 %v1009, %v1059
    %v1202 = vmul.f32 %v1010, %v1069
    %v1203 = vmul.f32 %v1011, %v1079
    %v1204 = vmul.f32 %v1012, %v1089
    %v1205 = vmul.f32 %v1013, %v1099
    %v1206 = vmul.f32 %v1014, %v1109
    %v1207 = vmul.f32 %v1015, %v1119
    %v1208 = vmul.f32 %v1016, %v1129
    %v1209 = vmul.f32 %v1017, %v1139
    %v1210 = vmul.f32 %v1018, %v1149
    %v1211 = vmul.f32 %v1019, %v1159
    %v1212 = vmul.f32 %v1020, %v1169
    %v1213 = vmul.f32 %v1021, %v1179
    %v1214 = vmul.f32 %v1022, %v1189
    %v1215 = vmul.f32 %v1023, %v1199
    %v1216 = vld [vmem:[%s3] sm:$0x1]
    %v1218 = vperm.slane %v1216, 0
    %v1220 = vmul.f32 %v1200, %v1218
    %v1221 = vmul.f32 %v1201, %v1218
    %v1222 = vmul.f32 %v1202, %v1218
    %v1223 = vmul.f32 %v1203, %v1218
    %v1224 = vmul.f32 %v1204, %v1218
    %v1225 = vmul.f32 %v1205, %v1218
    %v1226 = vmul.f32 %v1206, %v1218
    %v1227 = vmul.f32 %v1207, %v1218
    %v1228 = vmul.f32 %v1208, %v1218
    %v1229 = vmul.f32 %v1209, %v1218
    %v1230 = vmul.f32 %v1210, %v1218
    %v1231 = vmul.f32 %v1211, %v1218
    %v1232 = vmul.f32 %v1212, %v1218
    %v1233 = vmul.f32 %v1213, %v1218
    %v1234 = vmul.f32 %v1214, %v1218
    %v1235 = vmul.f32 %v1215, %v1218
    %v1236 = vld [vmem:[%s4] sm:$0x1]
    %v1238 = vperm.slane %v1236, 0
    %v1240 = vadd.f32 %v1220, %v1238
    %v1241 = vadd.f32 %v1221, %v1238
    %v1242 = vadd.f32 %v1222, %v1238
    %v1243 = vadd.f32 %v1223, %v1238
    %v1244 = vadd.f32 %v1224, %v1238
    %v1245 = vadd.f32 %v1225, %v1238
    %v1246 = vadd.f32 %v1226, %v1238
    %v1247 = vadd.f32 %v1227, %v1238
    %v1248 = vadd.f32 %v1228, %v1238
    %v1249 = vadd.f32 %v1229, %v1238
    %v1250 = vadd.f32 %v1230, %v1238
    %v1251 = vadd.f32 %v1231, %v1238
    %v1252 = vadd.f32 %v1232, %v1238
    %v1253 = vadd.f32 %v1233, %v1238
    %v1254 = vadd.f32 %v1234, %v1238
    %v1255 = vadd.f32 %v1235, %v1238
    %1256 = vst [vmem:[%s5] sm:$0xff] %v1240
    %1257 = vst [vmem:[%s5 + $0x8] sm:$0xff] %v1241
    %1258 = vst [vmem:[%s5 + $0x10] sm:$0xff] %v1242
    %1259 = vst [vmem:[%s5 + $0x18] sm:$0xff] %v1243
    %1260 = vst [vmem:[%s5 + $0x20] sm:$0xff] %v1244
    %1261 = vst [vmem:[%s5 + $0x28] sm:$0xff] %v1245
    %1262 = vst [vmem:[%s5 + $0x30] sm:$0xff] %v1246
    %1263 = vst [vmem:[%s5 + $0x38] sm:$0xff] %v1247
    %1264 = vst [vmem:[%s5 + $0x40] sm:$0xff] %v1248
    %1265 = vst [vmem:[%s5 + $0x48] sm:$0xff] %v1249
    %1266 = vst [vmem:[%s5 + $0x50] sm:$0xff] %v1250
    %1267 = vst [vmem:[%s5 + $0x58] sm:$0xff] %v1251
    %1268 = vst [vmem:[%s5 + $0x60] sm:$0xff] %v1252
    %1269 = vst [vmem:[%s5 + $0x68] sm:$0xff] %v1253
    %1270 = vst [vmem:[%s5 + $0x70] sm:$0xff] %v1254
    %1271 = vst [vmem:[%s5 + $0x78] sm:$0xff] %v1255
  $region29: #{gprgnn_forward.13} parent=0 // pred_fallthru
    _
  // Predicated region
  $region30: #{gprgnn_forward.13} parent=0 // pred_check
    _
  $region31: #{gprgnn_forward.13} parent=0 // pred_check_branch
    %1273 = sbr.rel (0) target = $region33
  $region32: #{gprgnn_forward.13} parent=0 // pred_region
    _
  $region33: #{gprgnn_forward.13} parent=0 // pred_fallthru
    _
  // Predicated region
  $region34: #{gprgnn_forward.13} parent=0 // pred_check
    _
  $region35: #{gprgnn_forward.13} parent=0 // pred_check_branch
    %1275 = sbr.rel (0) target = $region37
  $region36: #{gprgnn_forward.13} parent=0 // pred_region
    _
  $region37: #{gprgnn_forward.13} parent=0 // pred_fallthru
    _

</llo_original>
